<compile_context>
chip_gen: v5e
topology: v5e:2x2
jax: 0.10.0
libtpu: 0.0.40
codegen_flags: <defaults>
</compile_context>

<pallas_src>
import functools

import jax
import jax.numpy as jnp
from jax.experimental import pallas as pl
from jax.experimental.pallas import tpu as pltpu


# ---------------------------------------------------------------------------
# Helpers
# ---------------------------------------------------------------------------
def _round_up(x, m):
    return ((x + m - 1) // m) * m


def _largest_divisor_multiple(n, granule, cap):
    """Largest multiple of `granule` that divides n and is <= cap (assumes n % granule == 0)."""
    r = min(cap - (cap % granule), n)
    r -= r % granule
    while r >= granule:
        if n % r == 0:
            return r
        r -= granule
    return granule


def _pick_chunk(t):
    """Time-chunk for the recurrence: prefer exact divisors in {64,32,16,8}, otherwise a
    fixed chunk in {32,16,8} minimizing masked-tail waste (ties -> larger chunk)."""
    if t <= 8:
        return t
    for c in (64, 32, 16, 8):
        if t % c == 0:
            return c
    best, best_waste = 8, None
    for c in (32, 16, 8):
        waste = (-t) % c
        if best_waste is None or waste < best_waste:
            best, best_waste = c, waste
    return best


# ---------------------------------------------------------------------------
# Embedding gather.
# Path A (table fits VMEM): table resident in VMEM, in-kernel dynamic row reads.
# Path B (huge table):      rows DMA'd from HBM directly into the output block.
# ---------------------------------------------------------------------------
def _embed_vmem_kernel(ids_ref, table_ref, out_ref):
    i = pl.program_id(0)
    rows = out_ref.shape[0]
    for g in range(rows):                              # static, unrolled at trace time
        tok = ids_ref[i * rows + g]
        out_ref[pl.ds(g, 1), :] = table_ref[pl.ds(tok, 1), :].astype(out_ref.dtype)


def _embed_dma_kernel(ids_ref, table_hbm, out_ref, sems):
    # TODO(synk): no cross-step prefetch; per-block DMAs are at least all in flight at once.
    i = pl.program_id(0)
    rows = out_ref.shape[0]
    copies = []
    for g in range(rows):                              # static, unrolled at trace time
        tok = ids_ref[i * rows + g]
        cp = pltpu.make_async_copy(table_hbm.at[pl.ds(tok, 1), :],
                                   out_ref.at[pl.ds(g, 1), :], sems.at[g])
        cp.start()
        copies.append(cp)
    for cp in copies:
        cp.wait()


def embedding_lookup(ids_flat, table, rows_per_step, out_dtype):
    """ids_flat: (N,) int32 (N % rows_per_step == 0), table: (V, D) -> (N, D) out_dtype."""
    n = ids_flat.shape[0]
    v, d = table.shape
    table_bytes = v * d * table.dtype.itemsize

    if table_bytes <= (12 << 20):
        # Whole table resident in VMEM (copied once; constant index_map) -> no per-token DMA.
        return pl.pallas_call(
            _embed_vmem_kernel,
            out_shape=jax.ShapeDtypeStruct((n, d), out_dtype),
            grid_spec=pltpu.PrefetchScalarGridSpec(
                num_scalar_prefetch=1,
                grid=(n // rows_per_step,),
                in_specs=[pl.BlockSpec((v, d), lambda i, ids: (0, 0))],
                out_specs=pl.BlockSpec((rows_per_step, d), lambda i, ids: (i, 0)),
            ),
            compiler_params=pltpu.CompilerParams(
                dimension_semantics=("parallel",)),
        )(ids_flat, table)

    out = pl.pallas_call(
        _embed_dma_kernel,
        out_shape=jax.ShapeDtypeStruct((n, d), table.dtype),
        grid_spec=pltpu.PrefetchScalarGridSpec(
            num_scalar_prefetch=1,
            grid=(n // rows_per_step,),
            in_specs=[pl.BlockSpec(memory_space=pl.ANY)],      # table stays in HBM
            out_specs=pl.BlockSpec((rows_per_step, d), lambda i, ids: (i, 0)),
            scratch_shapes=[pltpu.SemaphoreType.DMA((rows_per_step,))],
        ),
        compiler_params=pltpu.CompilerParams(
            dimension_semantics=("parallel",)),
    )(ids_flat, table)
    return out.astype(out_dtype) if out.dtype != out_dtype else out


# ---------------------------------------------------------------------------
# Tiled matmul + bias:  out = x @ w + b   (input-gate precompute and decoder).
# cdiv grid on M/N so tiles stay MXU-friendly for awkward M; K must divide exactly
# (all K dims are pre-padded to multiples of 128).
# ---------------------------------------------------------------------------
def _matmul_bias_kernel(x_ref, w_ref, b_ref, o_ref, acc_ref):
    @pl.when(pl.program_id(2) == 0)
    def _():
        acc_ref[...] = jnp.zeros_like(acc_ref)

    acc_ref[...] += jnp.dot(x_ref[...], w_ref[...],
                            preferred_element_type=jnp.float32)

    @pl.when(pl.program_id(2) == pl.num_programs(2) - 1)
    def _():
        o_ref[...] = (acc_ref[...] + b_ref[...]).astype(o_ref.dtype)


def matmul_bias(x, w, b, *, out_dtype=jnp.float32,
                tm_target=256, tn_target=512, tk_target=512):
    """x: (M, K), w: (K, N), b: (1, N) -> (M, N).  M % 8 == 0, K/N % 128 == 0."""
    m, k = x.shape
    _, n = w.shape
    tm = min(tm_target, m)                               # m multiple of 8 (or full dim)
    tn = min(tn_target, n)                               # n multiple of 128 (or full dim)
    tk = _largest_divisor_multiple(k, 128, tk_target)    # exact divisor of k
    return pl.pallas_call(
        _matmul_bias_kernel,
        out_shape=jax.ShapeDtypeStruct((m, n), out_dtype),
        grid_spec=pltpu.PrefetchScalarGridSpec(
            num_scalar_prefetch=0,
            grid=(pl.cdiv(m, tm), pl.cdiv(n, tn), k // tk),
            in_specs=[
                pl.BlockSpec((tm, tk), lambda i, j, kk: (i, kk)),
                pl.BlockSpec((tk, tn), lambda i, j, kk: (kk, j)),
                pl.BlockSpec((1, tn), lambda i, j, kk: (0, j)),
            ],
            out_specs=pl.BlockSpec((tm, tn), lambda i, j, kk: (i, j)),
            scratch_shapes=[pltpu.VMEM((tm, tn), jnp.float32)],
        ),
        compiler_params=pltpu.CompilerParams(
            dimension_semantics=("parallel", "parallel", "arbitrary")),
    )(x, w, b)


# ---------------------------------------------------------------------------
# LSTM recurrence: grid over (batch blocks, time chunks); per step only
# h @ W_hh^T + xg[t].  Gate order matches PyTorch (i, f, g, o); the 4H axis is
# per-gate padded so every gate slice is lane-aligned.
# whh lives in HBM and is DMA'd once into a single VMEM scratch (no double-buffering).
# ---------------------------------------------------------------------------
def _lstm_rec_kernel(xg_ref, h0_ref, c0_ref, whh_hbm,
                     y_ref, hN_ref, cN_ref,
                     whh_v, h_s, c_s, dma_sem, *, t_real, chunk):
    t = pl.program_id(1)
    H = h_s.shape[-1]
    needs_mask = (t_real % chunk) != 0

    @pl.when(t == 0)
    def _():
        cp = pltpu.make_async_copy(whh_hbm, whh_v, dma_sem)
        cp.start()
        h_s[...] = h0_ref[...].astype(h_s.dtype)     # overlap init with the weight DMA
        c_s[...] = c0_ref[...].astype(c_s.dtype)
        cp.wait()

    def step(s, carry):
        gates = (jnp.dot(h_s[...], whh_v[...],
                         preferred_element_type=jnp.float32)
                 + xg_ref[s].astype(jnp.float32))                    # (B, 4H) in f32
        i = jax.nn.sigmoid(gates[:, 0 * H:1 * H])
        f = jax.nn.sigmoid(gates[:, 1 * H:2 * H])
        g = jnp.tanh(gates[:, 2 * H:3 * H])
        o = jax.nn.sigmoid(gates[:, 3 * H:4 * H])
        c_new = f * c_s[...] + i * g
        h_new = o * jnp.tanh(c_new)
        if needs_mask:                                # masked tail chunk (t_real % chunk != 0)
            valid = (t * chunk + s) < t_real
            c_new = jnp.where(valid, c_new, c_s[...])
            h_new = jnp.where(valid, h_new, h_s[...].astype(jnp.float32))
        c_s[...] = c_new
        h_s[...] = h_new.astype(h_s.dtype)
        y_ref[s] = h_s[...].astype(y_ref.dtype)
        return carry

    jax.lax.fori_loop(0, chunk, step, 0, unroll=True)

    @pl.when(t == pl.num_programs(1) - 1)
    def _():
        hN_ref[...] = h_s[...].astype(hN_ref.dtype)
        cN_ref[...] = c_s[...].astype(cN_ref.dtype)


def lstm_layer(xg, h0, c0, whh_t, *, chunk):
    """xg: (T, Pb, 4H) precomputed input gates, h0/c0: (Pb, H) f32, whh_t: (H, 4H)."""
    T, Pb, G4 = xg.shape
    H = h0.shape[-1]
    cdt = xg.dtype
    itemsize = jnp.dtype(cdt).itemsize

    nb = 2 if (Pb >= 16 and Pb % 16 == 0) else 1      # megacore batch sharding (v7x)
    bblk = Pb // nb
    n_t = pl.cdiv(T, chunk)

    # Explicit VMEM budget (single-buffered whh scratch + double-buffered xg/y blocks).
    budget = (H * G4 * itemsize
              + 2 * chunk * bblk * G4 * itemsize
              + 2 * chunk * bblk * H * itemsize
              + 8 * bblk * H * 4
              + (4 << 20))
    vmem_limit = int(min(max(2 * budget, 32 << 20), 112 << 20))

    kern = functools.partial(_lstm_rec_kernel, t_real=T, chunk=chunk)
    return pl.pallas_call(
        kern,
        out_shape=(
            jax.ShapeDtypeStruct((T, Pb, H), cdt),
            jax.ShapeDtypeStruct((Pb, H), jnp.float32),
            jax.ShapeDtypeStruct((Pb, H), jnp.float32),
        ),
        grid_spec=pltpu.PrefetchScalarGridSpec(
            num_scalar_prefetch=0,
            grid=(nb, n_t),
            in_specs=[
                pl.BlockSpec((chunk, bblk, G4), lambda b, t: (t, b, 0)),
                pl.BlockSpec((bblk, H), lambda b, t: (b, 0)),
                pl.BlockSpec((bblk, H), lambda b, t: (b, 0)),
                pl.BlockSpec(memory_space=pl.ANY),          # whh stays in HBM
            ],
            out_specs=(
                pl.BlockSpec((chunk, bblk, H), lambda b, t: (t, b, 0)),
                pl.BlockSpec((bblk, H), lambda b, t: (b, 0)),
                pl.BlockSpec((bblk, H), lambda b, t: (b, 0)),
            ),
            scratch_shapes=[
                pltpu.VMEM((H, G4), cdt),                   # resident whh (single buffer)
                pltpu.VMEM((bblk, H), cdt),                 # h state
                pltpu.VMEM((bblk, H), jnp.float32),         # c state kept in f32
                pltpu.SemaphoreType.DMA,
            ],
        ),
        compiler_params=pltpu.CompilerParams(
            dimension_semantics=("parallel", "arbitrary"),  # batch parallel, time serial
            vmem_limit_bytes=vmem_limit),
    )(xg, h0, c0, whh_t)


# ---------------------------------------------------------------------------
# Parameters: PyTorch-style init + one-time padding / transposition / dtype cast.
# ---------------------------------------------------------------------------
def init_params(key, ntoken, ninp, nhid, nlayers):
    initrange = 0.1
    k_enc, k_dec, k_rnn = jax.random.split(key, 3)
    params = {
        "encoder": jax.random.uniform(
            k_enc, (ntoken, ninp), jnp.float32, -initrange, initrange),
        "dec_w": jax.random.uniform(
            k_dec, (ntoken, nhid), jnp.float32, -initrange, initrange),
        "dec_b": jnp.zeros((ntoken,), jnp.float32),
    }
    stdv = 1.0 / jnp.sqrt(jnp.float32(nhid))
    keys = jax.random.split(k_rnn, 4 * nlayers)
    for l in range(nlayers):
        in_sz = ninp if l == 0 else nhid
        params[f"w_ih_{l}"] = jax.random.uniform(
            keys[4 * l + 0], (4 * nhid, in_sz), jnp.float32, -stdv, stdv)
        params[f"w_hh_{l}"] = jax.random.uniform(
            keys[4 * l + 1], (4 * nhid, nhid), jnp.float32, -stdv, stdv)
        params[f"b_ih_{l}"] = jax.random.uniform(
            keys[4 * l + 2], (4 * nhid,), jnp.float32, -stdv, stdv)
        params[f"b_hh_{l}"] = jax.random.uniform(
            keys[4 * l + 3], (4 * nhid,), jnp.float32, -stdv, stdv)
    return params


def prepare_params(params, ntoken, ninp, nhid, nlayers, compute_dtype=jnp.bfloat16):
    """Pad feature dims to 128 lanes, per-gate-pad the 4H axis, pre-transpose weights,
    cast the large weight/activation streams to compute_dtype (biases / encoder stay f32)."""
    Pinp = _round_up(ninp, 128)
    Ph = _round_up(nhid, 128)
    Pv = _round_up(ntoken, 128)
    cdt = compute_dtype
    prep = {"nlayers": nlayers, "ntoken": ntoken, "ninp": ninp, "nhid": nhid,
            "Pinp": Pinp, "Ph": Ph, "Pv": Pv, "compute_dtype": cdt}

    prep["encoder"] = jnp.pad(params["encoder"], ((0, 0), (0, Pinp - ninp)))

    for l in range(nlayers):
        in_sz = ninp if l == 0 else nhid
        Pin = Pinp if l == 0 else Ph
        wih = params[f"w_ih_{l}"].reshape(4, nhid, in_sz)
        wih = jnp.pad(wih, ((0, 0), (0, Ph - nhid), (0, Pin - in_sz)))
        prep[f"wih_t_{l}"] = jnp.transpose(wih, (2, 0, 1)).reshape(Pin, 4 * Ph).astype(cdt)
        whh = params[f"w_hh_{l}"].reshape(4, nhid, nhid)
        whh = jnp.pad(whh, ((0, 0), (0, Ph - nhid), (0, Ph - nhid)))
        prep[f"whh_t_{l}"] = jnp.transpose(whh, (2, 0, 1)).reshape(Ph, 4 * Ph).astype(cdt)
        b = (params[f"b_ih_{l}"] + params[f"b_hh_{l}"]).reshape(4, nhid)
        b = jnp.pad(b, ((0, 0), (0, Ph - nhid)))
        prep[f"bias_{l}"] = b.reshape(1, 4 * Ph)                     # f32

    dec_w = jnp.pad(params["dec_w"], ((0, Pv - ntoken), (0, Ph - nhid)))
    prep["dec_wt"] = dec_w.T.astype(cdt)                             # (Ph, Pv)
    prep["dec_b"] = jnp.pad(params["dec_b"], (0, Pv - ntoken)).reshape(1, Pv)
    return prep


# ---------------------------------------------------------------------------
# Full RNNModel forward (LSTM variant).
# ---------------------------------------------------------------------------
def rnn_model_forward(prep, input_ids, hidden):
    nlayers, ntoken, nhid = prep["nlayers"], prep["ntoken"], prep["nhid"]
    Pinp, Ph, Pv = prep["Pinp"], prep["Ph"], prep["Pv"]
    cdt = prep["compute_dtype"]
    T, B = input_ids.shape
    Pb = _round_up(max(B, 8), 8)

    # --- encoder (blocked gather); padded batch rows use token 0, sliced off later ---
    ids = jnp.pad(input_ids.astype(jnp.int32), ((0, 0), (0, Pb - B)))
    ids_flat = ids.reshape(-1)                                    # (T*Pb,)
    rows = _largest_divisor_multiple(T * Pb, 8, 128)
    x = embedding_lookup(ids_flat, prep["encoder"], rows, cdt)    # (T*Pb, Pinp)
    # dropout = identity (eval mode)

    # --- multi-layer LSTM ---
    h0s, c0s = hidden                                             # (nlayers, B, nhid)
    h0s = jnp.pad(h0s, ((0, 0), (0, Pb - B), (0, Ph - nhid))).astype(jnp.float32)
    c0s = jnp.pad(c0s, ((0, 0), (0, Pb - B), (0, Ph - nhid))).astype(jnp.float32)
    chunk = _pick_chunk(T)

    h_out, c_out = [], []
    for l in range(nlayers):
        # Hoisted input projection for all timesteps in one tiled MXU matmul.
        xg = matmul_bias(x, prep[f"wih_t_{l}"], prep[f"bias_{l}"], out_dtype=cdt)
        xg = xg.reshape(T, Pb, 4 * Ph)
        y, hN, cN = lstm_layer(xg, h0s[l], c0s[l], prep[f"whh_t_{l}"], chunk=chunk)
        h_out.append(hN[:B, :nhid])
        c_out.append(cN[:B, :nhid])
        x = y.reshape(T * Pb, Ph)                                 # inter-layer dropout = identity

    # --- decoder: tiled matmul + bias ---
    decoded = matmul_bias(x, prep["dec_wt"], prep["dec_b"], out_dtype=jnp.float32)
    decoded = decoded.reshape(T, Pb, Pv)[:, :B, :ntoken]
    return decoded, (jnp.stack(h_out), jnp.stack(c_out))


# ---------------------------------------------------------------------------
# Pure-JAX reference for correctness check (operates on the original f32 params).
# ---------------------------------------------------------------------------
def _lstm_layer_ref(x, h0, c0, w_ih, w_hh, b_ih, b_hh):
    def step(carry, xt):
        h, c = carry
        g = xt @ w_ih.T + h @ w_hh.T + b_ih + b_hh
        i, f, gg, o = jnp.split(g, 4, axis=-1)
        i, f, o = jax.nn.sigmoid(i), jax.nn.sigmoid(f), jax.nn.sigmoid(o)
        gg = jnp.tanh(gg)
        c = f * c + i * gg
        h = o * jnp.tanh(c)
        return (h, c), h

    (hN, cN), ys = jax.lax.scan(step, (h0, c0), x)
    return ys, hN, cN


def rnn_model_forward_ref(params, input_ids, hidden, nlayers):
    T, B = input_ids.shape
    x = jnp.take(params["encoder"], input_ids.reshape(-1), axis=0).reshape(T, B, -1)
    h0s, c0s = hidden
    h_out, c_out = [], []
    for l in range(nlayers):
        x, hN, cN = _lstm_layer_ref(
            x, h0s[l], c0s[l],
            params[f"w_ih_{l}"], params[f"w_hh_{l}"],
            params[f"b_ih_{l}"], params[f"b_hh_{l}"])
        h_out.append(hN)
        c_out.append(cN)
    dec = x.reshape(T * B, -1) @ params["dec_w"].T + params["dec_b"]
    return dec.reshape(T, B, -1), (jnp.stack(h_out), jnp.stack(c_out))


if __name__ == "__main__":
    ntoken, ninp, nhid, nlayers = 50, 16, 32, 2
    T, B = 8, 2

    key = jax.random.PRNGKey(0)
    k_param, k_ids = jax.random.split(key)
    params = init_params(k_param, ntoken, ninp, nhid, nlayers)

    input_ids = jax.random.randint(k_ids, (T, B), 0, ntoken, dtype=jnp.int32)
    hidden = (jnp.zeros((nlayers, B, nhid), jnp.float32),
              jnp.zeros((nlayers, B, nhid), jnp.float32))

    dec_ref, (hN_ref, cN_ref) = rnn_model_forward_ref(params, input_ids, hidden, nlayers)

    # --- f32 compute path: tight correctness check against the pure-JAX reference ---
    prep_f32 = prepare_params(params, ntoken, ninp, nhid, nlayers,
                              compute_dtype=jnp.float32)
    dec32, (h32, c32) = rnn_model_forward(prep_f32, input_ids, hidden)
    dec32 = jax.block_until_ready(dec32)
    h32 = jax.block_until_ready(h32)
    c32 = jax.block_until_ready(c32)
    assert dec32.shape == (T, B, ntoken)
    assert h32.shape == (nlayers, B, nhid) and c32.shape == (nlayers, B, nhid)
    assert jnp.allclose(dec32, dec_ref, atol=1e-4, rtol=1e-4)
    assert jnp.allclose(h32, hN_ref, atol=1e-4, rtol=1e-4)
    assert jnp.allclose(c32, cN_ref, atol=1e-4, rtol=1e-4)

    # --- bf16 storage path (performance config; gate math / accumulators stay f32) ---
    prep_bf16 = prepare_params(params, ntoken, ninp, nhid, nlayers,
                               compute_dtype=jnp.bfloat16)
    dec16, (h16, c16) = rnn_model_forward(prep_bf16, input_ids, hidden)
    dec16 = jax.block_until_ready(dec16)
    h16 = jax.block_until_ready(h16)
    c16 = jax.block_until_ready(c16)
    assert jnp.allclose(dec16, dec_ref, atol=3e-2, rtol=3e-2)
    assert jnp.allclose(h16, hN_ref, atol=3e-2, rtol=3e-2)
    assert jnp.allclose(c16, cN_ref, atol=3e-2, rtol=3e-2)

    print("KERNEL_OK")
</pallas_src>

<mosaic_0001>
module attributes {stable_mosaic.version = 11 : i64} {
  func.func @_embed_vmem_kernel(%arg0: i32, %arg1: memref<64xi32, #tpu.memory_space<smem>>, %arg2: memref<50x128xf32, #tpu.memory_space<vmem>>, %arg3: memref<64x128xf32, #tpu.memory_space<vmem>>) attributes {dimension_semantics = [#tpu.dimension_semantics<parallel>], iteration_bounds = array<i64: 1>, scalar_prefetch = 1 : i64, scratch_operands = 0 : i64, tpu.core_type = #tpu.core_type<tc>, window_params = [{pipeline_mode = #tpu.pipeline_mode<synchronous>, transform_indices = @transform_0, window_bounds = array<i64: 50, 128>}, {transform_indices = @transform_1, window_bounds = array<i64: 64, 128>}]} {
    %c64_i32 = arith.constant 64 : i32
    %0 = arith.muli %arg0, %c64_i32 : i32
    %c0_i32 = arith.constant 0 : i32
    %1 = arith.addi %0, %c0_i32 : i32
    %2 = arith.index_cast %1 : i32 to index
    %3 = memref.load %arg1[%2] : memref<64xi32, #tpu.memory_space<smem>>
    %4 = arith.index_cast %3 : i32 to index
    %c0 = arith.constant 0 : index
    %5 = vector.load %arg2[%4, %c0] : memref<50x128xf32, #tpu.memory_space<vmem>>, vector<1x128xf32>
    %c0_0 = arith.constant 0 : index
    %c0_1 = arith.constant 0 : index
    %6 = vector.load %arg3[%c0_0, %c0_1] : memref<64x128xf32, #tpu.memory_space<vmem>>, vector<1x128xf32>
    tpu.vector_store %arg3[%c0_0, %c0_1], %5 {strides = array<i32>} : memref<64x128xf32, #tpu.memory_space<vmem>>, vector<1x128xf32>,
    %c64_i32_2 = arith.constant 64 : i32
    %7 = arith.muli %arg0, %c64_i32_2 : i32
    %c1_i32 = arith.constant 1 : i32
    %8 = arith.addi %7, %c1_i32 : i32
    %9 = arith.index_cast %8 : i32 to index
    %10 = memref.load %arg1[%9] : memref<64xi32, #tpu.memory_space<smem>>
    %11 = arith.index_cast %10 : i32 to index
    %c0_3 = arith.constant 0 : index
    %12 = vector.load %arg2[%11, %c0_3] : memref<50x128xf32, #tpu.memory_space<vmem>>, vector<1x128xf32>
    %c1 = arith.constant 1 : index
    %c0_4 = arith.constant 0 : index
    %13 = vector.load %arg3[%c1, %c0_4] : memref<64x128xf32, #tpu.memory_space<vmem>>, vector<1x128xf32>
    tpu.vector_store %arg3[%c1, %c0_4], %12 {strides = array<i32>} : memref<64x128xf32, #tpu.memory_space<vmem>>, vector<1x128xf32>,
    %c64_i32_5 = arith.constant 64 : i32
    %14 = arith.muli %arg0, %c64_i32_5 : i32
    %c2_i32 = arith.constant 2 : i32
    %15 = arith.addi %14, %c2_i32 : i32
    %16 = arith.index_cast %15 : i32 to index
    %17 = memref.load %arg1[%16] : memref<64xi32, #tpu.memory_space<smem>>
    %18 = arith.index_cast %17 : i32 to index
    %c0_6 = arith.constant 0 : index
    %19 = vector.load %arg2[%18, %c0_6] : memref<50x128xf32, #tpu.memory_space<vmem>>, vector<1x128xf32>
    %c2 = arith.constant 2 : index
    %c0_7 = arith.constant 0 : index
    %20 = vector.load %arg3[%c2, %c0_7] : memref<64x128xf32, #tpu.memory_space<vmem>>, vector<1x128xf32>
    tpu.vector_store %arg3[%c2, %c0_7], %19 {strides = array<i32>} : memref<64x128xf32, #tpu.memory_space<vmem>>, vector<1x128xf32>,
    %c64_i32_8 = arith.constant 64 : i32
    %21 = arith.muli %arg0, %c64_i32_8 : i32
    %c3_i32 = arith.constant 3 : i32
    %22 = arith.addi %21, %c3_i32 : i32
    %23 = arith.index_cast %22 : i32 to index
    %24 = memref.load %arg1[%23] : memref<64xi32, #tpu.memory_space<smem>>
    %25 = arith.index_cast %24 : i32 to index
    %c0_9 = arith.constant 0 : index
    %26 = vector.load %arg2[%25, %c0_9] : memref<50x128xf32, #tpu.memory_space<vmem>>, vector<1x128xf32>
    %c3 = arith.constant 3 : index
    %c0_10 = arith.constant 0 : index
    %27 = vector.load %arg3[%c3, %c0_10] : memref<64x128xf32, #tpu.memory_space<vmem>>, vector<1x128xf32>
    tpu.vector_store %arg3[%c3, %c0_10], %26 {strides = array<i32>} : memref<64x128xf32, #tpu.memory_space<vmem>>, vector<1x128xf32>,
    %c64_i32_11 = arith.constant 64 : i32
    %28 = arith.muli %arg0, %c64_i32_11 : i32
    %c4_i32 = arith.constant 4 : i32
    %29 = arith.addi %28, %c4_i32 : i32
    %30 = arith.index_cast %29 : i32 to index
    %31 = memref.load %arg1[%30] : memref<64xi32, #tpu.memory_space<smem>>
    %32 = arith.index_cast %31 : i32 to index
    %c0_12 = arith.constant 0 : index
    %33 = vector.load %arg2[%32, %c0_12] : memref<50x128xf32, #tpu.memory_space<vmem>>, vector<1x128xf32>
    %c4 = arith.constant 4 : index
    %c0_13 = arith.constant 0 : index
    %34 = vector.load %arg3[%c4, %c0_13] : memref<64x128xf32, #tpu.memory_space<vmem>>, vector<1x128xf32>
    tpu.vector_store %arg3[%c4, %c0_13], %33 {strides = array<i32>} : memref<64x128xf32, #tpu.memory_space<vmem>>, vector<1x128xf32>,
    %c64_i32_14 = arith.constant 64 : i32
    %35 = arith.muli %arg0, %c64_i32_14 : i32
    %c5_i32 = arith.constant 5 : i32
    %36 = arith.addi %35, %c5_i32 : i32
    %37 = arith.index_cast %36 : i32 to index
    %38 = memref.load %arg1[%37] : memref<64xi32, #tpu.memory_space<smem>>
    %39 = arith.index_cast %38 : i32 to index
    %c0_15 = arith.constant 0 : index
    %40 = vector.load %arg2[%39, %c0_15] : memref<50x128xf32, #tpu.memory_space<vmem>>, vector<1x128xf32>
    %c5 = arith.constant 5 : index
    %c0_16 = arith.constant 0 : index
    %41 = vector.load %arg3[%c5, %c0_16] : memref<64x128xf32, #tpu.memory_space<vmem>>, vector<1x128xf32>
    tpu.vector_store %arg3[%c5, %c0_16], %40 {strides = array<i32>} : memref<64x128xf32, #tpu.memory_space<vmem>>, vector<1x128xf32>,
    %c64_i32_17 = arith.constant 64 : i32
    %42 = arith.muli %arg0, %c64_i32_17 : i32
    %c6_i32 = arith.constant 6 : i32
    %43 = arith.addi %42, %c6_i32 : i32
    %44 = arith.index_cast %43 : i32 to index
    %45 = memref.load %arg1[%44] : memref<64xi32, #tpu.memory_space<smem>>
    %46 = arith.index_cast %45 : i32 to index
    %c0_18 = arith.constant 0 : index
    %47 = vector.load %arg2[%46, %c0_18] : memref<50x128xf32, #tpu.memory_space<vmem>>, vector<1x128xf32>
    %c6 = arith.constant 6 : index
    %c0_19 = arith.constant 0 : index
    %48 = vector.load %arg3[%c6, %c0_19] : memref<64x128xf32, #tpu.memory_space<vmem>>, vector<1x128xf32>
    tpu.vector_store %arg3[%c6, %c0_19], %47 {strides = array<i32>} : memref<64x128xf32, #tpu.memory_space<vmem>>, vector<1x128xf32>,
    %c64_i32_20 = arith.constant 64 : i32
    %49 = arith.muli %arg0, %c64_i32_20 : i32
    %c7_i32 = arith.constant 7 : i32
    %50 = arith.addi %49, %c7_i32 : i32
    %51 = arith.index_cast %50 : i32 to index
    %52 = memref.load %arg1[%51] : memref<64xi32, #tpu.memory_space<smem>>
    %53 = arith.index_cast %52 : i32 to index
    %c0_21 = arith.constant 0 : index
    %54 = vector.load %arg2[%53, %c0_21] : memref<50x128xf32, #tpu.memory_space<vmem>>, vector<1x128xf32>
    %c7 = arith.constant 7 : index
    %c0_22 = arith.constant 0 : index
    %55 = vector.load %arg3[%c7, %c0_22] : memref<64x128xf32, #tpu.memory_space<vmem>>, vector<1x128xf32>
    tpu.vector_store %arg3[%c7, %c0_22], %54 {strides = array<i32>} : memref<64x128xf32, #tpu.memory_space<vmem>>, vector<1x128xf32>,
    %c64_i32_23 = arith.constant 64 : i32
    %56 = arith.muli %arg0, %c64_i32_23 : i32
    %c8_i32 = arith.constant 8 : i32
    %57 = arith.addi %56, %c8_i32 : i32
    %58 = arith.index_cast %57 : i32 to index
    %59 = memref.load %arg1[%58] : memref<64xi32, #tpu.memory_space<smem>>
    %60 = arith.index_cast %59 : i32 to index
    %c0_24 = arith.constant 0 : index
    %61 = vector.load %arg2[%60, %c0_24] : memref<50x128xf32, #tpu.memory_space<vmem>>, vector<1x128xf32>
    %c8 = arith.constant 8 : index
    %c0_25 = arith.constant 0 : index
    %62 = vector.load %arg3[%c8, %c0_25] : memref<64x128xf32, #tpu.memory_space<vmem>>, vector<1x128xf32>
    tpu.vector_store %arg3[%c8, %c0_25], %61 {strides = array<i32>} : memref<64x128xf32, #tpu.memory_space<vmem>>, vector<1x128xf32>,
    %c64_i32_26 = arith.constant 64 : i32
    %63 = arith.muli %arg0, %c64_i32_26 : i32
    %c9_i32 = arith.constant 9 : i32
    %64 = arith.addi %63, %c9_i32 : i32
    %65 = arith.index_cast %64 : i32 to index
    %66 = memref.load %arg1[%65] : memref<64xi32, #tpu.memory_space<smem>>
    %67 = arith.index_cast %66 : i32 to index
    %c0_27 = arith.constant 0 : index
    %68 = vector.load %arg2[%67, %c0_27] : memref<50x128xf32, #tpu.memory_space<vmem>>, vector<1x128xf32>
    %c9 = arith.constant 9 : index
    %c0_28 = arith.constant 0 : index
    %69 = vector.load %arg3[%c9, %c0_28] : memref<64x128xf32, #tpu.memory_space<vmem>>, vector<1x128xf32>
    tpu.vector_store %arg3[%c9, %c0_28], %68 {strides = array<i32>} : memref<64x128xf32, #tpu.memory_space<vmem>>, vector<1x128xf32>,
    %c64_i32_29 = arith.constant 64 : i32
    %70 = arith.muli %arg0, %c64_i32_29 : i32
    %c10_i32 = arith.constant 10 : i32
    %71 = arith.addi %70, %c10_i32 : i32
    %72 = arith.index_cast %71 : i32 to index
    %73 = memref.load %arg1[%72] : memref<64xi32, #tpu.memory_space<smem>>
    %74 = arith.index_cast %73 : i32 to index
    %c0_30 = arith.constant 0 : index
    %75 = vector.load %arg2[%74, %c0_30] : memref<50x128xf32, #tpu.memory_space<vmem>>, vector<1x128xf32>
    %c10 = arith.constant 10 : index
    %c0_31 = arith.constant 0 : index
    %76 = vector.load %arg3[%c10, %c0_31] : memref<64x128xf32, #tpu.memory_space<vmem>>, vector<1x128xf32>
    tpu.vector_store %arg3[%c10, %c0_31], %75 {strides = array<i32>} : memref<64x128xf32, #tpu.memory_space<vmem>>, vector<1x128xf32>,
    %c64_i32_32 = arith.constant 64 : i32
    %77 = arith.muli %arg0, %c64_i32_32 : i32
    %c11_i32 = arith.constant 11 : i32
    %78 = arith.addi %77, %c11_i32 : i32
    %79 = arith.index_cast %78 : i32 to index
    %80 = memref.load %arg1[%79] : memref<64xi32, #tpu.memory_space<smem>>
    %81 = arith.index_cast %80 : i32 to index
    %c0_33 = arith.constant 0 : index
    %82 = vector.load %arg2[%81, %c0_33] : memref<50x128xf32, #tpu.memory_space<vmem>>, vector<1x128xf32>
    %c11 = arith.constant 11 : index
    %c0_34 = arith.constant 0 : index
    %83 = vector.load %arg3[%c11, %c0_34] : memref<64x128xf32, #tpu.memory_space<vmem>>, vector<1x128xf32>
    tpu.vector_store %arg3[%c11, %c0_34], %82 {strides = array<i32>} : memref<64x128xf32, #tpu.memory_space<vmem>>, vector<1x128xf32>,
    %c64_i32_35 = arith.constant 64 : i32
    %84 = arith.muli %arg0, %c64_i32_35 : i32
    %c12_i32 = arith.constant 12 : i32
    %85 = arith.addi %84, %c12_i32 : i32
    %86 = arith.index_cast %85 : i32 to index
    %87 = memref.load %arg1[%86] : memref<64xi32, #tpu.memory_space<smem>>
    %88 = arith.index_cast %87 : i32 to index
    %c0_36 = arith.constant 0 : index
    %89 = vector.load %arg2[%88, %c0_36] : memref<50x128xf32, #tpu.memory_space<vmem>>, vector<1x128xf32>
    %c12 = arith.constant 12 : index
    %c0_37 = arith.constant 0 : index
    %90 = vector.load %arg3[%c12, %c0_37] : memref<64x128xf32, #tpu.memory_space<vmem>>, vector<1x128xf32>
    tpu.vector_store %arg3[%c12, %c0_37], %89 {strides = array<i32>} : memref<64x128xf32, #tpu.memory_space<vmem>>, vector<1x128xf32>,
    %c64_i32_38 = arith.constant 64 : i32
    %91 = arith.muli %arg0, %c64_i32_38 : i32
    %c13_i32 = arith.constant 13 : i32
    %92 = arith.addi %91, %c13_i32 : i32
    %93 = arith.index_cast %92 : i32 to index
    %94 = memref.load %arg1[%93] : memref<64xi32, #tpu.memory_space<smem>>
    %95 = arith.index_cast %94 : i32 to index
    %c0_39 = arith.constant 0 : index
    %96 = vector.load %arg2[%95, %c0_39] : memref<50x128xf32, #tpu.memory_space<vmem>>, vector<1x128xf32>
    %c13 = arith.constant 13 : index
    %c0_40 = arith.constant 0 : index
    %97 = vector.load %arg3[%c13, %c0_40] : memref<64x128xf32, #tpu.memory_space<vmem>>, vector<1x128xf32>
    tpu.vector_store %arg3[%c13, %c0_40], %96 {strides = array<i32>} : memref<64x128xf32, #tpu.memory_space<vmem>>, vector<1x128xf32>,
    %c64_i32_41 = arith.constant 64 : i32
    %98 = arith.muli %arg0, %c64_i32_41 : i32
    %c14_i32 = arith.constant 14 : i32
    %99 = arith.addi %98, %c14_i32 : i32
    %100 = arith.index_cast %99 : i32 to index
    %101 = memref.load %arg1[%100] : memref<64xi32, #tpu.memory_space<smem>>
    %102 = arith.index_cast %101 : i32 to index
    %c0_42 = arith.constant 0 : index
    %103 = vector.load %arg2[%102, %c0_42] : memref<50x128xf32, #tpu.memory_space<vmem>>, vector<1x128xf32>
    %c14 = arith.constant 14 : index
    %c0_43 = arith.constant 0 : index
    %104 = vector.load %arg3[%c14, %c0_43] : memref<64x128xf32, #tpu.memory_space<vmem>>, vector<1x128xf32>
    tpu.vector_store %arg3[%c14, %c0_43], %103 {strides = array<i32>} : memref<64x128xf32, #tpu.memory_space<vmem>>, vector<1x128xf32>,
    %c64_i32_44 = arith.constant 64 : i32
    %105 = arith.muli %arg0, %c64_i32_44 : i32
    %c15_i32 = arith.constant 15 : i32
    %106 = arith.addi %105, %c15_i32 : i32
    %107 = arith.index_cast %106 : i32 to index
    %108 = memref.load %arg1[%107] : memref<64xi32, #tpu.memory_space<smem>>
    %109 = arith.index_cast %108 : i32 to index
    %c0_45 = arith.constant 0 : index
    %110 = vector.load %arg2[%109, %c0_45] : memref<50x128xf32, #tpu.memory_space<vmem>>, vector<1x128xf32>
    %c15 = arith.constant 15 : index
    %c0_46 = arith.constant 0 : index
    %111 = vector.load %arg3[%c15, %c0_46] : memref<64x128xf32, #tpu.memory_space<vmem>>, vector<1x128xf32>
    tpu.vector_store %arg3[%c15, %c0_46], %110 {strides = array<i32>} : memref<64x128xf32, #tpu.memory_space<vmem>>, vector<1x128xf32>,
    %c64_i32_47 = arith.constant 64 : i32
    %112 = arith.muli %arg0, %c64_i32_47 : i32
    %c16_i32 = arith.constant 16 : i32
    %113 = arith.addi %112, %c16_i32 : i32
    %114 = arith.index_cast %113 : i32 to index
    %115 = memref.load %arg1[%114] : memref<64xi32, #tpu.memory_space<smem>>
    %116 = arith.index_cast %115 : i32 to index
    %c0_48 = arith.constant 0 : index
    %117 = vector.load %arg2[%116, %c0_48] : memref<50x128xf32, #tpu.memory_space<vmem>>, vector<1x128xf32>
    %c16 = arith.constant 16 : index
    %c0_49 = arith.constant 0 : index
    %118 = vector.load %arg3[%c16, %c0_49] : memref<64x128xf32, #tpu.memory_space<vmem>>, vector<1x128xf32>
    tpu.vector_store %arg3[%c16, %c0_49], %117 {strides = array<i32>} : memref<64x128xf32, #tpu.memory_space<vmem>>, vector<1x128xf32>,
    %c64_i32_50 = arith.constant 64 : i32
    %119 = arith.muli %arg0, %c64_i32_50 : i32
    %c17_i32 = arith.constant 17 : i32
    %120 = arith.addi %119, %c17_i32 : i32
    %121 = arith.index_cast %120 : i32 to index
    %122 = memref.load %arg1[%121] : memref<64xi32, #tpu.memory_space<smem>>
    %123 = arith.index_cast %122 : i32 to index
    %c0_51 = arith.constant 0 : index
    %124 = vector.load %arg2[%123, %c0_51] : memref<50x128xf32, #tpu.memory_space<vmem>>, vector<1x128xf32>
    %c17 = arith.constant 17 : index
    %c0_52 = arith.constant 0 : index
    %125 = vector.load %arg3[%c17, %c0_52] : memref<64x128xf32, #tpu.memory_space<vmem>>, vector<1x128xf32>
    tpu.vector_store %arg3[%c17, %c0_52], %124 {strides = array<i32>} : memref<64x128xf32, #tpu.memory_space<vmem>>, vector<1x128xf32>,
    %c64_i32_53 = arith.constant 64 : i32
    %126 = arith.muli %arg0, %c64_i32_53 : i32
    %c18_i32 = arith.constant 18 : i32
    %127 = arith.addi %126, %c18_i32 : i32
    %128 = arith.index_cast %127 : i32 to index
    %129 = memref.load %arg1[%128] : memref<64xi32, #tpu.memory_space<smem>>
    %130 = arith.index_cast %129 : i32 to index
    %c0_54 = arith.constant 0 : index
    %131 = vector.load %arg2[%130, %c0_54] : memref<50x128xf32, #tpu.memory_space<vmem>>, vector<1x128xf32>
    %c18 = arith.constant 18 : index
    %c0_55 = arith.constant 0 : index
    %132 = vector.load %arg3[%c18, %c0_55] : memref<64x128xf32, #tpu.memory_space<vmem>>, vector<1x128xf32>
    tpu.vector_store %arg3[%c18, %c0_55], %131 {strides = array<i32>} : memref<64x128xf32, #tpu.memory_space<vmem>>, vector<1x128xf32>,
    %c64_i32_56 = arith.constant 64 : i32
    %133 = arith.muli %arg0, %c64_i32_56 : i32
    %c19_i32 = arith.constant 19 : i32
    %134 = arith.addi %133, %c19_i32 : i32
    %135 = arith.index_cast %134 : i32 to index
    %136 = memref.load %arg1[%135] : memref<64xi32, #tpu.memory_space<smem>>
    %137 = arith.index_cast %136 : i32 to index
    %c0_57 = arith.constant 0 : index
    %138 = vector.load %arg2[%137, %c0_57] : memref<50x128xf32, #tpu.memory_space<vmem>>, vector<1x128xf32>
    %c19 = arith.constant 19 : index
    %c0_58 = arith.constant 0 : index
    %139 = vector.load %arg3[%c19, %c0_58] : memref<64x128xf32, #tpu.memory_space<vmem>>, vector<1x128xf32>
    tpu.vector_store %arg3[%c19, %c0_58], %138 {strides = array<i32>} : memref<64x128xf32, #tpu.memory_space<vmem>>, vector<1x128xf32>,
    %c64_i32_59 = arith.constant 64 : i32
    %140 = arith.muli %arg0, %c64_i32_59 : i32
    %c20_i32 = arith.constant 20 : i32
    %141 = arith.addi %140, %c20_i32 : i32
    %142 = arith.index_cast %141 : i32 to index
    %143 = memref.load %arg1[%142] : memref<64xi32, #tpu.memory_space<smem>>
    %144 = arith.index_cast %143 : i32 to index
    %c0_60 = arith.constant 0 : index
    %145 = vector.load %arg2[%144, %c0_60] : memref<50x128xf32, #tpu.memory_space<vmem>>, vector<1x128xf32>
    %c20 = arith.constant 20 : index
    %c0_61 = arith.constant 0 : index
    %146 = vector.load %arg3[%c20, %c0_61] : memref<64x128xf32, #tpu.memory_space<vmem>>, vector<1x128xf32>
    tpu.vector_store %arg3[%c20, %c0_61], %145 {strides = array<i32>} : memref<64x128xf32, #tpu.memory_space<vmem>>, vector<1x128xf32>,
    %c64_i32_62 = arith.constant 64 : i32
    %147 = arith.muli %arg0, %c64_i32_62 : i32
    %c21_i32 = arith.constant 21 : i32
    %148 = arith.addi %147, %c21_i32 : i32
    %149 = arith.index_cast %148 : i32 to index
    %150 = memref.load %arg1[%149] : memref<64xi32, #tpu.memory_space<smem>>
    %151 = arith.index_cast %150 : i32 to index
    %c0_63 = arith.constant 0 : index
    %152 = vector.load %arg2[%151, %c0_63] : memref<50x128xf32, #tpu.memory_space<vmem>>, vector<1x128xf32>
    %c21 = arith.constant 21 : index
    %c0_64 = arith.constant 0 : index
    %153 = vector.load %arg3[%c21, %c0_64] : memref<64x128xf32, #tpu.memory_space<vmem>>, vector<1x128xf32>
    tpu.vector_store %arg3[%c21, %c0_64], %152 {strides = array<i32>} : memref<64x128xf32, #tpu.memory_space<vmem>>, vector<1x128xf32>,
    %c64_i32_65 = arith.constant 64 : i32
    %154 = arith.muli %arg0, %c64_i32_65 : i32
    %c22_i32 = arith.constant 22 : i32
    %155 = arith.addi %154, %c22_i32 : i32
    %156 = arith.index_cast %155 : i32 to index
    %157 = memref.load %arg1[%156] : memref<64xi32, #tpu.memory_space<smem>>
    %158 = arith.index_cast %157 : i32 to index
    %c0_66 = arith.constant 0 : index
    %159 = vector.load %arg2[%158, %c0_66] : memref<50x128xf32, #tpu.memory_space<vmem>>, vector<1x128xf32>
    %c22 = arith.constant 22 : index
    %c0_67 = arith.constant 0 : index
    %160 = vector.load %arg3[%c22, %c0_67] : memref<64x128xf32, #tpu.memory_space<vmem>>, vector<1x128xf32>
    tpu.vector_store %arg3[%c22, %c0_67], %159 {strides = array<i32>} : memref<64x128xf32, #tpu.memory_space<vmem>>, vector<1x128xf32>,
    %c64_i32_68 = arith.constant 64 : i32
    %161 = arith.muli %arg0, %c64_i32_68 : i32
    %c23_i32 = arith.constant 23 : i32
    %162 = arith.addi %161, %c23_i32 : i32
    %163 = arith.index_cast %162 : i32 to index
    %164 = memref.load %arg1[%163] : memref<64xi32, #tpu.memory_space<smem>>
    %165 = arith.index_cast %164 : i32 to index
    %c0_69 = arith.constant 0 : index
    %166 = vector.load %arg2[%165, %c0_69] : memref<50x128xf32, #tpu.memory_space<vmem>>, vector<1x128xf32>
    %c23 = arith.constant 23 : index
    %c0_70 = arith.constant 0 : index
    %167 = vector.load %arg3[%c23, %c0_70] : memref<64x128xf32, #tpu.memory_space<vmem>>, vector<1x128xf32>
    tpu.vector_store %arg3[%c23, %c0_70], %166 {strides = array<i32>} : memref<64x128xf32, #tpu.memory_space<vmem>>, vector<1x128xf32>,
    %c64_i32_71 = arith.constant 64 : i32
    %168 = arith.muli %arg0, %c64_i32_71 : i32
    %c24_i32 = arith.constant 24 : i32
    %169 = arith.addi %168, %c24_i32 : i32
    %170 = arith.index_cast %169 : i32 to index
    %171 = memref.load %arg1[%170] : memref<64xi32, #tpu.memory_space<smem>>
    %172 = arith.index_cast %171 : i32 to index
    %c0_72 = arith.constant 0 : index
    %173 = vector.load %arg2[%172, %c0_72] : memref<50x128xf32, #tpu.memory_space<vmem>>, vector<1x128xf32>
    %c24 = arith.constant 24 : index
    %c0_73 = arith.constant 0 : index
    %174 = vector.load %arg3[%c24, %c0_73] : memref<64x128xf32, #tpu.memory_space<vmem>>, vector<1x128xf32>
    tpu.vector_store %arg3[%c24, %c0_73], %173 {strides = array<i32>} : memref<64x128xf32, #tpu.memory_space<vmem>>, vector<1x128xf32>,
    %c64_i32_74 = arith.constant 64 : i32
    %175 = arith.muli %arg0, %c64_i32_74 : i32
    %c25_i32 = arith.constant 25 : i32
    %176 = arith.addi %175, %c25_i32 : i32
    %177 = arith.index_cast %176 : i32 to index
    %178 = memref.load %arg1[%177] : memref<64xi32, #tpu.memory_space<smem>>
    %179 = arith.index_cast %178 : i32 to index
    %c0_75 = arith.constant 0 : index
    %180 = vector.load %arg2[%179, %c0_75] : memref<50x128xf32, #tpu.memory_space<vmem>>, vector<1x128xf32>
    %c25 = arith.constant 25 : index
    %c0_76 = arith.constant 0 : index
    %181 = vector.load %arg3[%c25, %c0_76] : memref<64x128xf32, #tpu.memory_space<vmem>>, vector<1x128xf32>
    tpu.vector_store %arg3[%c25, %c0_76], %180 {strides = array<i32>} : memref<64x128xf32, #tpu.memory_space<vmem>>, vector<1x128xf32>,
    %c64_i32_77 = arith.constant 64 : i32
    %182 = arith.muli %arg0, %c64_i32_77 : i32
    %c26_i32 = arith.constant 26 : i32
    %183 = arith.addi %182, %c26_i32 : i32
    %184 = arith.index_cast %183 : i32 to index
    %185 = memref.load %arg1[%184] : memref<64xi32, #tpu.memory_space<smem>>
    %186 = arith.index_cast %185 : i32 to index
    %c0_78 = arith.constant 0 : index
    %187 = vector.load %arg2[%186, %c0_78] : memref<50x128xf32, #tpu.memory_space<vmem>>, vector<1x128xf32>
    %c26 = arith.constant 26 : index
    %c0_79 = arith.constant 0 : index
    %188 = vector.load %arg3[%c26, %c0_79] : memref<64x128xf32, #tpu.memory_space<vmem>>, vector<1x128xf32>
    tpu.vector_store %arg3[%c26, %c0_79], %187 {strides = array<i32>} : memref<64x128xf32, #tpu.memory_space<vmem>>, vector<1x128xf32>,
    %c64_i32_80 = arith.constant 64 : i32
    %189 = arith.muli %arg0, %c64_i32_80 : i32
    %c27_i32 = arith.constant 27 : i32
    %190 = arith.addi %189, %c27_i32 : i32
    %191 = arith.index_cast %190 : i32 to index
    %192 = memref.load %arg1[%191] : memref<64xi32, #tpu.memory_space<smem>>
    %193 = arith.index_cast %192 : i32 to index
    %c0_81 = arith.constant 0 : index
    %194 = vector.load %arg2[%193, %c0_81] : memref<50x128xf32, #tpu.memory_space<vmem>>, vector<1x128xf32>
    %c27 = arith.constant 27 : index
    %c0_82 = arith.constant 0 : index
    %195 = vector.load %arg3[%c27, %c0_82] : memref<64x128xf32, #tpu.memory_space<vmem>>, vector<1x128xf32>
    tpu.vector_store %arg3[%c27, %c0_82], %194 {strides = array<i32>} : memref<64x128xf32, #tpu.memory_space<vmem>>, vector<1x128xf32>,
    %c64_i32_83 = arith.constant 64 : i32
    %196 = arith.muli %arg0, %c64_i32_83 : i32
    %c28_i32 = arith.constant 28 : i32
    %197 = arith.addi %196, %c28_i32 : i32
    %198 = arith.index_cast %197 : i32 to index
    %199 = memref.load %arg1[%198] : memref<64xi32, #tpu.memory_space<smem>>
    %200 = arith.index_cast %199 : i32 to index
    %c0_84 = arith.constant 0 : index
    %201 = vector.load %arg2[%200, %c0_84] : memref<50x128xf32, #tpu.memory_space<vmem>>, vector<1x128xf32>
    %c28 = arith.constant 28 : index
    %c0_85 = arith.constant 0 : index
    %202 = vector.load %arg3[%c28, %c0_85] : memref<64x128xf32, #tpu.memory_space<vmem>>, vector<1x128xf32>
    tpu.vector_store %arg3[%c28, %c0_85], %201 {strides = array<i32>} : memref<64x128xf32, #tpu.memory_space<vmem>>, vector<1x128xf32>,
    %c64_i32_86 = arith.constant 64 : i32
    %203 = arith.muli %arg0, %c64_i32_86 : i32
    %c29_i32 = arith.constant 29 : i32
    %204 = arith.addi %203, %c29_i32 : i32
    %205 = arith.index_cast %204 : i32 to index
    %206 = memref.load %arg1[%205] : memref<64xi32, #tpu.memory_space<smem>>
    %207 = arith.index_cast %206 : i32 to index
    %c0_87 = arith.constant 0 : index
    %208 = vector.load %arg2[%207, %c0_87] : memref<50x128xf32, #tpu.memory_space<vmem>>, vector<1x128xf32>
    %c29 = arith.constant 29 : index
    %c0_88 = arith.constant 0 : index
    %209 = vector.load %arg3[%c29, %c0_88] : memref<64x128xf32, #tpu.memory_space<vmem>>, vector<1x128xf32>
    tpu.vector_store %arg3[%c29, %c0_88], %208 {strides = array<i32>} : memref<64x128xf32, #tpu.memory_space<vmem>>, vector<1x128xf32>,
    %c64_i32_89 = arith.constant 64 : i32
    %210 = arith.muli %arg0, %c64_i32_89 : i32
    %c30_i32 = arith.constant 30 : i32
    %211 = arith.addi %210, %c30_i32 : i32
    %212 = arith.index_cast %211 : i32 to index
    %213 = memref.load %arg1[%212] : memref<64xi32, #tpu.memory_space<smem>>
    %214 = arith.index_cast %213 : i32 to index
    %c0_90 = arith.constant 0 : index
    %215 = vector.load %arg2[%214, %c0_90] : memref<50x128xf32, #tpu.memory_space<vmem>>, vector<1x128xf32>
    %c30 = arith.constant 30 : index
    %c0_91 = arith.constant 0 : index
    %216 = vector.load %arg3[%c30, %c0_91] : memref<64x128xf32, #tpu.memory_space<vmem>>, vector<1x128xf32>
    tpu.vector_store %arg3[%c30, %c0_91], %215 {strides = array<i32>} : memref<64x128xf32, #tpu.memory_space<vmem>>, vector<1x128xf32>,
    %c64_i32_92 = arith.constant 64 : i32
    %217 = arith.muli %arg0, %c64_i32_92 : i32
    %c31_i32 = arith.constant 31 : i32
    %218 = arith.addi %217, %c31_i32 : i32
    %219 = arith.index_cast %218 : i32 to index
    %220 = memref.load %arg1[%219] : memref<64xi32, #tpu.memory_space<smem>>
    %221 = arith.index_cast %220 : i32 to index
    %c0_93 = arith.constant 0 : index
    %222 = vector.load %arg2[%221, %c0_93] : memref<50x128xf32, #tpu.memory_space<vmem>>, vector<1x128xf32>
    %c31 = arith.constant 31 : index
    %c0_94 = arith.constant 0 : index
    %223 = vector.load %arg3[%c31, %c0_94] : memref<64x128xf32, #tpu.memory_space<vmem>>, vector<1x128xf32>
    tpu.vector_store %arg3[%c31, %c0_94], %222 {strides = array<i32>} : memref<64x128xf32, #tpu.memory_space<vmem>>, vector<1x128xf32>,
    %c64_i32_95 = arith.constant 64 : i32
    %224 = arith.muli %arg0, %c64_i32_95 : i32
    %c32_i32 = arith.constant 32 : i32
    %225 = arith.addi %224, %c32_i32 : i32
    %226 = arith.index_cast %225 : i32 to index
    %227 = memref.load %arg1[%226] : memref<64xi32, #tpu.memory_space<smem>>
    %228 = arith.index_cast %227 : i32 to index
    %c0_96 = arith.constant 0 : index
    %229 = vector.load %arg2[%228, %c0_96] : memref<50x128xf32, #tpu.memory_space<vmem>>, vector<1x128xf32>
    %c32 = arith.constant 32 : index
    %c0_97 = arith.constant 0 : index
    %230 = vector.load %arg3[%c32, %c0_97] : memref<64x128xf32, #tpu.memory_space<vmem>>, vector<1x128xf32>
    tpu.vector_store %arg3[%c32, %c0_97], %229 {strides = array<i32>} : memref<64x128xf32, #tpu.memory_space<vmem>>, vector<1x128xf32>,
    %c64_i32_98 = arith.constant 64 : i32
    %231 = arith.muli %arg0, %c64_i32_98 : i32
    %c33_i32 = arith.constant 33 : i32
    %232 = arith.addi %231, %c33_i32 : i32
    %233 = arith.index_cast %232 : i32 to index
    %234 = memref.load %arg1[%233] : memref<64xi32, #tpu.memory_space<smem>>
    %235 = arith.index_cast %234 : i32 to index
    %c0_99 = arith.constant 0 : index
    %236 = vector.load %arg2[%235, %c0_99] : memref<50x128xf32, #tpu.memory_space<vmem>>, vector<1x128xf32>
    %c33 = arith.constant 33 : index
    %c0_100 = arith.constant 0 : index
    %237 = vector.load %arg3[%c33, %c0_100] : memref<64x128xf32, #tpu.memory_space<vmem>>, vector<1x128xf32>
    tpu.vector_store %arg3[%c33, %c0_100], %236 {strides = array<i32>} : memref<64x128xf32, #tpu.memory_space<vmem>>, vector<1x128xf32>,
    %c64_i32_101 = arith.constant 64 : i32
    %238 = arith.muli %arg0, %c64_i32_101 : i32
    %c34_i32 = arith.constant 34 : i32
    %239 = arith.addi %238, %c34_i32 : i32
    %240 = arith.index_cast %239 : i32 to index
    %241 = memref.load %arg1[%240] : memref<64xi32, #tpu.memory_space<smem>>
    %242 = arith.index_cast %241 : i32 to index
    %c0_102 = arith.constant 0 : index
    %243 = vector.load %arg2[%242, %c0_102] : memref<50x128xf32, #tpu.memory_space<vmem>>, vector<1x128xf32>
    %c34 = arith.constant 34 : index
    %c0_103 = arith.constant 0 : index
    %244 = vector.load %arg3[%c34, %c0_103] : memref<64x128xf32, #tpu.memory_space<vmem>>, vector<1x128xf32>
    tpu.vector_store %arg3[%c34, %c0_103], %243 {strides = array<i32>} : memref<64x128xf32, #tpu.memory_space<vmem>>, vector<1x128xf32>,
    %c64_i32_104 = arith.constant 64 : i32
    %245 = arith.muli %arg0, %c64_i32_104 : i32
    %c35_i32 = arith.constant 35 : i32
    %246 = arith.addi %245, %c35_i32 : i32
    %247 = arith.index_cast %246 : i32 to index
    %248 = memref.load %arg1[%247] : memref<64xi32, #tpu.memory_space<smem>>
    %249 = arith.index_cast %248 : i32 to index
    %c0_105 = arith.constant 0 : index
    %250 = vector.load %arg2[%249, %c0_105] : memref<50x128xf32, #tpu.memory_space<vmem>>, vector<1x128xf32>
    %c35 = arith.constant 35 : index
    %c0_106 = arith.constant 0 : index
    %251 = vector.load %arg3[%c35, %c0_106] : memref<64x128xf32, #tpu.memory_space<vmem>>, vector<1x128xf32>
    tpu.vector_store %arg3[%c35, %c0_106], %250 {strides = array<i32>} : memref<64x128xf32, #tpu.memory_space<vmem>>, vector<1x128xf32>,
    %c64_i32_107 = arith.constant 64 : i32
    %252 = arith.muli %arg0, %c64_i32_107 : i32
    %c36_i32 = arith.constant 36 : i32
    %253 = arith.addi %252, %c36_i32 : i32
    %254 = arith.index_cast %253 : i32 to index
    %255 = memref.load %arg1[%254] : memref<64xi32, #tpu.memory_space<smem>>
    %256 = arith.index_cast %255 : i32 to index
    %c0_108 = arith.constant 0 : index
    %257 = vector.load %arg2[%256, %c0_108] : memref<50x128xf32, #tpu.memory_space<vmem>>, vector<1x128xf32>
    %c36 = arith.constant 36 : index
    %c0_109 = arith.constant 0 : index
    %258 = vector.load %arg3[%c36, %c0_109] : memref<64x128xf32, #tpu.memory_space<vmem>>, vector<1x128xf32>
    tpu.vector_store %arg3[%c36, %c0_109], %257 {strides = array<i32>} : memref<64x128xf32, #tpu.memory_space<vmem>>, vector<1x128xf32>,
    %c64_i32_110 = arith.constant 64 : i32
    %259 = arith.muli %arg0, %c64_i32_110 : i32
    %c37_i32 = arith.constant 37 : i32
    %260 = arith.addi %259, %c37_i32 : i32
    %261 = arith.index_cast %260 : i32 to index
    %262 = memref.load %arg1[%261] : memref<64xi32, #tpu.memory_space<smem>>
    %263 = arith.index_cast %262 : i32 to index
    %c0_111 = arith.constant 0 : index
    %264 = vector.load %arg2[%263, %c0_111] : memref<50x128xf32, #tpu.memory_space<vmem>>, vector<1x128xf32>
    %c37 = arith.constant 37 : index
    %c0_112 = arith.constant 0 : index
    %265 = vector.load %arg3[%c37, %c0_112] : memref<64x128xf32, #tpu.memory_space<vmem>>, vector<1x128xf32>
    tpu.vector_store %arg3[%c37, %c0_112], %264 {strides = array<i32>} : memref<64x128xf32, #tpu.memory_space<vmem>>, vector<1x128xf32>,
    %c64_i32_113 = arith.constant 64 : i32
    %266 = arith.muli %arg0, %c64_i32_113 : i32
    %c38_i32 = arith.constant 38 : i32
    %267 = arith.addi %266, %c38_i32 : i32
    %268 = arith.index_cast %267 : i32 to index
    %269 = memref.load %arg1[%268] : memref<64xi32, #tpu.memory_space<smem>>
    %270 = arith.index_cast %269 : i32 to index
    %c0_114 = arith.constant 0 : index
    %271 = vector.load %arg2[%270, %c0_114] : memref<50x128xf32, #tpu.memory_space<vmem>>, vector<1x128xf32>
    %c38 = arith.constant 38 : index
    %c0_115 = arith.constant 0 : index
    %272 = vector.load %arg3[%c38, %c0_115] : memref<64x128xf32, #tpu.memory_space<vmem>>, vector<1x128xf32>
    tpu.vector_store %arg3[%c38, %c0_115], %271 {strides = array<i32>} : memref<64x128xf32, #tpu.memory_space<vmem>>, vector<1x128xf32>,
    %c64_i32_116 = arith.constant 64 : i32
    %273 = arith.muli %arg0, %c64_i32_116 : i32
    %c39_i32 = arith.constant 39 : i32
    %274 = arith.addi %273, %c39_i32 : i32
    %275 = arith.index_cast %274 : i32 to index
    %276 = memref.load %arg1[%275] : memref<64xi32, #tpu.memory_space<smem>>
    %277 = arith.index_cast %276 : i32 to index
    %c0_117 = arith.constant 0 : index
    %278 = vector.load %arg2[%277, %c0_117] : memref<50x128xf32, #tpu.memory_space<vmem>>, vector<1x128xf32>
    %c39 = arith.constant 39 : index
    %c0_118 = arith.constant 0 : index
    %279 = vector.load %arg3[%c39, %c0_118] : memref<64x128xf32, #tpu.memory_space<vmem>>, vector<1x128xf32>
    tpu.vector_store %arg3[%c39, %c0_118], %278 {strides = array<i32>} : memref<64x128xf32, #tpu.memory_space<vmem>>, vector<1x128xf32>,
    %c64_i32_119 = arith.constant 64 : i32
    %280 = arith.muli %arg0, %c64_i32_119 : i32
    %c40_i32 = arith.constant 40 : i32
    %281 = arith.addi %280, %c40_i32 : i32
    %282 = arith.index_cast %281 : i32 to index
    %283 = memref.load %arg1[%282] : memref<64xi32, #tpu.memory_space<smem>>
    %284 = arith.index_cast %283 : i32 to index
    %c0_120 = arith.constant 0 : index
    %285 = vector.load %arg2[%284, %c0_120] : memref<50x128xf32, #tpu.memory_space<vmem>>, vector<1x128xf32>
    %c40 = arith.constant 40 : index
    %c0_121 = arith.constant 0 : index
    %286 = vector.load %arg3[%c40, %c0_121] : memref<64x128xf32, #tpu.memory_space<vmem>>, vector<1x128xf32>
    tpu.vector_store %arg3[%c40, %c0_121], %285 {strides = array<i32>} : memref<64x128xf32, #tpu.memory_space<vmem>>, vector<1x128xf32>,
    %c64_i32_122 = arith.constant 64 : i32
    %287 = arith.muli %arg0, %c64_i32_122 : i32
    %c41_i32 = arith.constant 41 : i32
    %288 = arith.addi %287, %c41_i32 : i32
    %289 = arith.index_cast %288 : i32 to index
    %290 = memref.load %arg1[%289] : memref<64xi32, #tpu.memory_space<smem>>
    %291 = arith.index_cast %290 : i32 to index
    %c0_123 = arith.constant 0 : index
    %292 = vector.load %arg2[%291, %c0_123] : memref<50x128xf32, #tpu.memory_space<vmem>>, vector<1x128xf32>
    %c41 = arith.constant 41 : index
    %c0_124 = arith.constant 0 : index
    %293 = vector.load %arg3[%c41, %c0_124] : memref<64x128xf32, #tpu.memory_space<vmem>>, vector<1x128xf32>
    tpu.vector_store %arg3[%c41, %c0_124], %292 {strides = array<i32>} : memref<64x128xf32, #tpu.memory_space<vmem>>, vector<1x128xf32>,
    %c64_i32_125 = arith.constant 64 : i32
    %294 = arith.muli %arg0, %c64_i32_125 : i32
    %c42_i32 = arith.constant 42 : i32
    %295 = arith.addi %294, %c42_i32 : i32
    %296 = arith.index_cast %295 : i32 to index
    %297 = memref.load %arg1[%296] : memref<64xi32, #tpu.memory_space<smem>>
    %298 = arith.index_cast %297 : i32 to index
    %c0_126 = arith.constant 0 : index
    %299 = vector.load %arg2[%298, %c0_126] : memref<50x128xf32, #tpu.memory_space<vmem>>, vector<1x128xf32>
    %c42 = arith.constant 42 : index
    %c0_127 = arith.constant 0 : index
    %300 = vector.load %arg3[%c42, %c0_127] : memref<64x128xf32, #tpu.memory_space<vmem>>, vector<1x128xf32>
    tpu.vector_store %arg3[%c42, %c0_127], %299 {strides = array<i32>} : memref<64x128xf32, #tpu.memory_space<vmem>>, vector<1x128xf32>,
    %c64_i32_128 = arith.constant 64 : i32
    %301 = arith.muli %arg0, %c64_i32_128 : i32
    %c43_i32 = arith.constant 43 : i32
    %302 = arith.addi %301, %c43_i32 : i32
    %303 = arith.index_cast %302 : i32 to index
    %304 = memref.load %arg1[%303] : memref<64xi32, #tpu.memory_space<smem>>
    %305 = arith.index_cast %304 : i32 to index
    %c0_129 = arith.constant 0 : index
    %306 = vector.load %arg2[%305, %c0_129] : memref<50x128xf32, #tpu.memory_space<vmem>>, vector<1x128xf32>
    %c43 = arith.constant 43 : index
    %c0_130 = arith.constant 0 : index
    %307 = vector.load %arg3[%c43, %c0_130] : memref<64x128xf32, #tpu.memory_space<vmem>>, vector<1x128xf32>
    tpu.vector_store %arg3[%c43, %c0_130], %306 {strides = array<i32>} : memref<64x128xf32, #tpu.memory_space<vmem>>, vector<1x128xf32>,
    %c64_i32_131 = arith.constant 64 : i32
    %308 = arith.muli %arg0, %c64_i32_131 : i32
    %c44_i32 = arith.constant 44 : i32
    %309 = arith.addi %308, %c44_i32 : i32
    %310 = arith.index_cast %309 : i32 to index
    %311 = memref.load %arg1[%310] : memref<64xi32, #tpu.memory_space<smem>>
    %312 = arith.index_cast %311 : i32 to index
    %c0_132 = arith.constant 0 : index
    %313 = vector.load %arg2[%312, %c0_132] : memref<50x128xf32, #tpu.memory_space<vmem>>, vector<1x128xf32>
    %c44 = arith.constant 44 : index
    %c0_133 = arith.constant 0 : index
    %314 = vector.load %arg3[%c44, %c0_133] : memref<64x128xf32, #tpu.memory_space<vmem>>, vector<1x128xf32>
    tpu.vector_store %arg3[%c44, %c0_133], %313 {strides = array<i32>} : memref<64x128xf32, #tpu.memory_space<vmem>>, vector<1x128xf32>,
    %c64_i32_134 = arith.constant 64 : i32
    %315 = arith.muli %arg0, %c64_i32_134 : i32
    %c45_i32 = arith.constant 45 : i32
    %316 = arith.addi %315, %c45_i32 : i32
    %317 = arith.index_cast %316 : i32 to index
    %318 = memref.load %arg1[%317] : memref<64xi32, #tpu.memory_space<smem>>
    %319 = arith.index_cast %318 : i32 to index
    %c0_135 = arith.constant 0 : index
    %320 = vector.load %arg2[%319, %c0_135] : memref<50x128xf32, #tpu.memory_space<vmem>>, vector<1x128xf32>
    %c45 = arith.constant 45 : index
    %c0_136 = arith.constant 0 : index
    %321 = vector.load %arg3[%c45, %c0_136] : memref<64x128xf32, #tpu.memory_space<vmem>>, vector<1x128xf32>
    tpu.vector_store %arg3[%c45, %c0_136], %320 {strides = array<i32>} : memref<64x128xf32, #tpu.memory_space<vmem>>, vector<1x128xf32>,
    %c64_i32_137 = arith.constant 64 : i32
    %322 = arith.muli %arg0, %c64_i32_137 : i32
    %c46_i32 = arith.constant 46 : i32
    %323 = arith.addi %322, %c46_i32 : i32
    %324 = arith.index_cast %323 : i32 to index
    %325 = memref.load %arg1[%324] : memref<64xi32, #tpu.memory_space<smem>>
    %326 = arith.index_cast %325 : i32 to index
    %c0_138 = arith.constant 0 : index
    %327 = vector.load %arg2[%326, %c0_138] : memref<50x128xf32, #tpu.memory_space<vmem>>, vector<1x128xf32>
    %c46 = arith.constant 46 : index
    %c0_139 = arith.constant 0 : index
    %328 = vector.load %arg3[%c46, %c0_139] : memref<64x128xf32, #tpu.memory_space<vmem>>, vector<1x128xf32>
    tpu.vector_store %arg3[%c46, %c0_139], %327 {strides = array<i32>} : memref<64x128xf32, #tpu.memory_space<vmem>>, vector<1x128xf32>,
    %c64_i32_140 = arith.constant 64 : i32
    %329 = arith.muli %arg0, %c64_i32_140 : i32
    %c47_i32 = arith.constant 47 : i32
    %330 = arith.addi %329, %c47_i32 : i32
    %331 = arith.index_cast %330 : i32 to index
    %332 = memref.load %arg1[%331] : memref<64xi32, #tpu.memory_space<smem>>
    %333 = arith.index_cast %332 : i32 to index
    %c0_141 = arith.constant 0 : index
    %334 = vector.load %arg2[%333, %c0_141] : memref<50x128xf32, #tpu.memory_space<vmem>>, vector<1x128xf32>
    %c47 = arith.constant 47 : index
    %c0_142 = arith.constant 0 : index
    %335 = vector.load %arg3[%c47, %c0_142] : memref<64x128xf32, #tpu.memory_space<vmem>>, vector<1x128xf32>
    tpu.vector_store %arg3[%c47, %c0_142], %334 {strides = array<i32>} : memref<64x128xf32, #tpu.memory_space<vmem>>, vector<1x128xf32>,
    %c64_i32_143 = arith.constant 64 : i32
    %336 = arith.muli %arg0, %c64_i32_143 : i32
    %c48_i32 = arith.constant 48 : i32
    %337 = arith.addi %336, %c48_i32 : i32
    %338 = arith.index_cast %337 : i32 to index
    %339 = memref.load %arg1[%338] : memref<64xi32, #tpu.memory_space<smem>>
    %340 = arith.index_cast %339 : i32 to index
    %c0_144 = arith.constant 0 : index
    %341 = vector.load %arg2[%340, %c0_144] : memref<50x128xf32, #tpu.memory_space<vmem>>, vector<1x128xf32>
    %c48 = arith.constant 48 : index
    %c0_145 = arith.constant 0 : index
    %342 = vector.load %arg3[%c48, %c0_145] : memref<64x128xf32, #tpu.memory_space<vmem>>, vector<1x128xf32>
    tpu.vector_store %arg3[%c48, %c0_145], %341 {strides = array<i32>} : memref<64x128xf32, #tpu.memory_space<vmem>>, vector<1x128xf32>,
    %c64_i32_146 = arith.constant 64 : i32
    %343 = arith.muli %arg0, %c64_i32_146 : i32
    %c49_i32 = arith.constant 49 : i32
    %344 = arith.addi %343, %c49_i32 : i32
    %345 = arith.index_cast %344 : i32 to index
    %346 = memref.load %arg1[%345] : memref<64xi32, #tpu.memory_space<smem>>
    %347 = arith.index_cast %346 : i32 to index
    %c0_147 = arith.constant 0 : index
    %348 = vector.load %arg2[%347, %c0_147] : memref<50x128xf32, #tpu.memory_space<vmem>>, vector<1x128xf32>
    %c49 = arith.constant 49 : index
    %c0_148 = arith.constant 0 : index
    %349 = vector.load %arg3[%c49, %c0_148] : memref<64x128xf32, #tpu.memory_space<vmem>>, vector<1x128xf32>
    tpu.vector_store %arg3[%c49, %c0_148], %348 {strides = array<i32>} : memref<64x128xf32, #tpu.memory_space<vmem>>, vector<1x128xf32>,
    %c64_i32_149 = arith.constant 64 : i32
    %350 = arith.muli %arg0, %c64_i32_149 : i32
    %c50_i32 = arith.constant 50 : i32
    %351 = arith.addi %350, %c50_i32 : i32
    %352 = arith.index_cast %351 : i32 to index
    %353 = memref.load %arg1[%352] : memref<64xi32, #tpu.memory_space<smem>>
    %354 = arith.index_cast %353 : i32 to index
    %c0_150 = arith.constant 0 : index
    %355 = vector.load %arg2[%354, %c0_150] : memref<50x128xf32, #tpu.memory_space<vmem>>, vector<1x128xf32>
    %c50 = arith.constant 50 : index
    %c0_151 = arith.constant 0 : index
    %356 = vector.load %arg3[%c50, %c0_151] : memref<64x128xf32, #tpu.memory_space<vmem>>, vector<1x128xf32>
    tpu.vector_store %arg3[%c50, %c0_151], %355 {strides = array<i32>} : memref<64x128xf32, #tpu.memory_space<vmem>>, vector<1x128xf32>,
    %c64_i32_152 = arith.constant 64 : i32
    %357 = arith.muli %arg0, %c64_i32_152 : i32
    %c51_i32 = arith.constant 51 : i32
    %358 = arith.addi %357, %c51_i32 : i32
    %359 = arith.index_cast %358 : i32 to index
    %360 = memref.load %arg1[%359] : memref<64xi32, #tpu.memory_space<smem>>
    %361 = arith.index_cast %360 : i32 to index
    %c0_153 = arith.constant 0 : index
    %362 = vector.load %arg2[%361, %c0_153] : memref<50x128xf32, #tpu.memory_space<vmem>>, vector<1x128xf32>
    %c51 = arith.constant 51 : index
    %c0_154 = arith.constant 0 : index
    %363 = vector.load %arg3[%c51, %c0_154] : memref<64x128xf32, #tpu.memory_space<vmem>>, vector<1x128xf32>
    tpu.vector_store %arg3[%c51, %c0_154], %362 {strides = array<i32>} : memref<64x128xf32, #tpu.memory_space<vmem>>, vector<1x128xf32>,
    %c64_i32_155 = arith.constant 64 : i32
    %364 = arith.muli %arg0, %c64_i32_155 : i32
    %c52_i32 = arith.constant 52 : i32
    %365 = arith.addi %364, %c52_i32 : i32
    %366 = arith.index_cast %365 : i32 to index
    %367 = memref.load %arg1[%366] : memref<64xi32, #tpu.memory_space<smem>>
    %368 = arith.index_cast %367 : i32 to index
    %c0_156 = arith.constant 0 : index
    %369 = vector.load %arg2[%368, %c0_156] : memref<50x128xf32, #tpu.memory_space<vmem>>, vector<1x128xf32>
    %c52 = arith.constant 52 : index
    %c0_157 = arith.constant 0 : index
    %370 = vector.load %arg3[%c52, %c0_157] : memref<64x128xf32, #tpu.memory_space<vmem>>, vector<1x128xf32>
    tpu.vector_store %arg3[%c52, %c0_157], %369 {strides = array<i32>} : memref<64x128xf32, #tpu.memory_space<vmem>>, vector<1x128xf32>,
    %c64_i32_158 = arith.constant 64 : i32
    %371 = arith.muli %arg0, %c64_i32_158 : i32
    %c53_i32 = arith.constant 53 : i32
    %372 = arith.addi %371, %c53_i32 : i32
    %373 = arith.index_cast %372 : i32 to index
    %374 = memref.load %arg1[%373] : memref<64xi32, #tpu.memory_space<smem>>
    %375 = arith.index_cast %374 : i32 to index
    %c0_159 = arith.constant 0 : index
    %376 = vector.load %arg2[%375, %c0_159] : memref<50x128xf32, #tpu.memory_space<vmem>>, vector<1x128xf32>
    %c53 = arith.constant 53 : index
    %c0_160 = arith.constant 0 : index
    %377 = vector.load %arg3[%c53, %c0_160] : memref<64x128xf32, #tpu.memory_space<vmem>>, vector<1x128xf32>
    tpu.vector_store %arg3[%c53, %c0_160], %376 {strides = array<i32>} : memref<64x128xf32, #tpu.memory_space<vmem>>, vector<1x128xf32>,
    %c64_i32_161 = arith.constant 64 : i32
    %378 = arith.muli %arg0, %c64_i32_161 : i32
    %c54_i32 = arith.constant 54 : i32
    %379 = arith.addi %378, %c54_i32 : i32
    %380 = arith.index_cast %379 : i32 to index
    %381 = memref.load %arg1[%380] : memref<64xi32, #tpu.memory_space<smem>>
    %382 = arith.index_cast %381 : i32 to index
    %c0_162 = arith.constant 0 : index
    %383 = vector.load %arg2[%382, %c0_162] : memref<50x128xf32, #tpu.memory_space<vmem>>, vector<1x128xf32>
    %c54 = arith.constant 54 : index
    %c0_163 = arith.constant 0 : index
    %384 = vector.load %arg3[%c54, %c0_163] : memref<64x128xf32, #tpu.memory_space<vmem>>, vector<1x128xf32>
    tpu.vector_store %arg3[%c54, %c0_163], %383 {strides = array<i32>} : memref<64x128xf32, #tpu.memory_space<vmem>>, vector<1x128xf32>,
    %c64_i32_164 = arith.constant 64 : i32
    %385 = arith.muli %arg0, %c64_i32_164 : i32
    %c55_i32 = arith.constant 55 : i32
    %386 = arith.addi %385, %c55_i32 : i32
    %387 = arith.index_cast %386 : i32 to index
    %388 = memref.load %arg1[%387] : memref<64xi32, #tpu.memory_space<smem>>
    %389 = arith.index_cast %388 : i32 to index
    %c0_165 = arith.constant 0 : index
    %390 = vector.load %arg2[%389, %c0_165] : memref<50x128xf32, #tpu.memory_space<vmem>>, vector<1x128xf32>
    %c55 = arith.constant 55 : index
    %c0_166 = arith.constant 0 : index
    %391 = vector.load %arg3[%c55, %c0_166] : memref<64x128xf32, #tpu.memory_space<vmem>>, vector<1x128xf32>
    tpu.vector_store %arg3[%c55, %c0_166], %390 {strides = array<i32>} : memref<64x128xf32, #tpu.memory_space<vmem>>, vector<1x128xf32>,
    %c64_i32_167 = arith.constant 64 : i32
    %392 = arith.muli %arg0, %c64_i32_167 : i32
    %c56_i32 = arith.constant 56 : i32
    %393 = arith.addi %392, %c56_i32 : i32
    %394 = arith.index_cast %393 : i32 to index
    %395 = memref.load %arg1[%394] : memref<64xi32, #tpu.memory_space<smem>>
    %396 = arith.index_cast %395 : i32 to index
    %c0_168 = arith.constant 0 : index
    %397 = vector.load %arg2[%396, %c0_168] : memref<50x128xf32, #tpu.memory_space<vmem>>, vector<1x128xf32>
    %c56 = arith.constant 56 : index
    %c0_169 = arith.constant 0 : index
    %398 = vector.load %arg3[%c56, %c0_169] : memref<64x128xf32, #tpu.memory_space<vmem>>, vector<1x128xf32>
    tpu.vector_store %arg3[%c56, %c0_169], %397 {strides = array<i32>} : memref<64x128xf32, #tpu.memory_space<vmem>>, vector<1x128xf32>,
    %c64_i32_170 = arith.constant 64 : i32
    %399 = arith.muli %arg0, %c64_i32_170 : i32
    %c57_i32 = arith.constant 57 : i32
    %400 = arith.addi %399, %c57_i32 : i32
    %401 = arith.index_cast %400 : i32 to index
    %402 = memref.load %arg1[%401] : memref<64xi32, #tpu.memory_space<smem>>
    %403 = arith.index_cast %402 : i32 to index
    %c0_171 = arith.constant 0 : index
    %404 = vector.load %arg2[%403, %c0_171] : memref<50x128xf32, #tpu.memory_space<vmem>>, vector<1x128xf32>
    %c57 = arith.constant 57 : index
    %c0_172 = arith.constant 0 : index
    %405 = vector.load %arg3[%c57, %c0_172] : memref<64x128xf32, #tpu.memory_space<vmem>>, vector<1x128xf32>
    tpu.vector_store %arg3[%c57, %c0_172], %404 {strides = array<i32>} : memref<64x128xf32, #tpu.memory_space<vmem>>, vector<1x128xf32>,
    %c64_i32_173 = arith.constant 64 : i32
    %406 = arith.muli %arg0, %c64_i32_173 : i32
    %c58_i32 = arith.constant 58 : i32
    %407 = arith.addi %406, %c58_i32 : i32
    %408 = arith.index_cast %407 : i32 to index
    %409 = memref.load %arg1[%408] : memref<64xi32, #tpu.memory_space<smem>>
    %410 = arith.index_cast %409 : i32 to index
    %c0_174 = arith.constant 0 : index
    %411 = vector.load %arg2[%410, %c0_174] : memref<50x128xf32, #tpu.memory_space<vmem>>, vector<1x128xf32>
    %c58 = arith.constant 58 : index
    %c0_175 = arith.constant 0 : index
    %412 = vector.load %arg3[%c58, %c0_175] : memref<64x128xf32, #tpu.memory_space<vmem>>, vector<1x128xf32>
    tpu.vector_store %arg3[%c58, %c0_175], %411 {strides = array<i32>} : memref<64x128xf32, #tpu.memory_space<vmem>>, vector<1x128xf32>,
    %c64_i32_176 = arith.constant 64 : i32
    %413 = arith.muli %arg0, %c64_i32_176 : i32
    %c59_i32 = arith.constant 59 : i32
    %414 = arith.addi %413, %c59_i32 : i32
    %415 = arith.index_cast %414 : i32 to index
    %416 = memref.load %arg1[%415] : memref<64xi32, #tpu.memory_space<smem>>
    %417 = arith.index_cast %416 : i32 to index
    %c0_177 = arith.constant 0 : index
    %418 = vector.load %arg2[%417, %c0_177] : memref<50x128xf32, #tpu.memory_space<vmem>>, vector<1x128xf32>
    %c59 = arith.constant 59 : index
    %c0_178 = arith.constant 0 : index
    %419 = vector.load %arg3[%c59, %c0_178] : memref<64x128xf32, #tpu.memory_space<vmem>>, vector<1x128xf32>
    tpu.vector_store %arg3[%c59, %c0_178], %418 {strides = array<i32>} : memref<64x128xf32, #tpu.memory_space<vmem>>, vector<1x128xf32>,
    %c64_i32_179 = arith.constant 64 : i32
    %420 = arith.muli %arg0, %c64_i32_179 : i32
    %c60_i32 = arith.constant 60 : i32
    %421 = arith.addi %420, %c60_i32 : i32
    %422 = arith.index_cast %421 : i32 to index
    %423 = memref.load %arg1[%422] : memref<64xi32, #tpu.memory_space<smem>>
    %424 = arith.index_cast %423 : i32 to index
    %c0_180 = arith.constant 0 : index
    %425 = vector.load %arg2[%424, %c0_180] : memref<50x128xf32, #tpu.memory_space<vmem>>, vector<1x128xf32>
    %c60 = arith.constant 60 : index
    %c0_181 = arith.constant 0 : index
    %426 = vector.load %arg3[%c60, %c0_181] : memref<64x128xf32, #tpu.memory_space<vmem>>, vector<1x128xf32>
    tpu.vector_store %arg3[%c60, %c0_181], %425 {strides = array<i32>} : memref<64x128xf32, #tpu.memory_space<vmem>>, vector<1x128xf32>,
    %c64_i32_182 = arith.constant 64 : i32
    %427 = arith.muli %arg0, %c64_i32_182 : i32
    %c61_i32 = arith.constant 61 : i32
    %428 = arith.addi %427, %c61_i32 : i32
    %429 = arith.index_cast %428 : i32 to index
    %430 = memref.load %arg1[%429] : memref<64xi32, #tpu.memory_space<smem>>
    %431 = arith.index_cast %430 : i32 to index
    %c0_183 = arith.constant 0 : index
    %432 = vector.load %arg2[%431, %c0_183] : memref<50x128xf32, #tpu.memory_space<vmem>>, vector<1x128xf32>
    %c61 = arith.constant 61 : index
    %c0_184 = arith.constant 0 : index
    %433 = vector.load %arg3[%c61, %c0_184] : memref<64x128xf32, #tpu.memory_space<vmem>>, vector<1x128xf32>
    tpu.vector_store %arg3[%c61, %c0_184], %432 {strides = array<i32>} : memref<64x128xf32, #tpu.memory_space<vmem>>, vector<1x128xf32>,
    %c64_i32_185 = arith.constant 64 : i32
    %434 = arith.muli %arg0, %c64_i32_185 : i32
    %c62_i32 = arith.constant 62 : i32
    %435 = arith.addi %434, %c62_i32 : i32
    %436 = arith.index_cast %435 : i32 to index
    %437 = memref.load %arg1[%436] : memref<64xi32, #tpu.memory_space<smem>>
    %438 = arith.index_cast %437 : i32 to index
    %c0_186 = arith.constant 0 : index
    %439 = vector.load %arg2[%438, %c0_186] : memref<50x128xf32, #tpu.memory_space<vmem>>, vector<1x128xf32>
    %c62 = arith.constant 62 : index
    %c0_187 = arith.constant 0 : index
    %440 = vector.load %arg3[%c62, %c0_187] : memref<64x128xf32, #tpu.memory_space<vmem>>, vector<1x128xf32>
    tpu.vector_store %arg3[%c62, %c0_187], %439 {strides = array<i32>} : memref<64x128xf32, #tpu.memory_space<vmem>>, vector<1x128xf32>,
    %c64_i32_188 = arith.constant 64 : i32
    %441 = arith.muli %arg0, %c64_i32_188 : i32
    %c63_i32 = arith.constant 63 : i32
    %442 = arith.addi %441, %c63_i32 : i32
    %443 = arith.index_cast %442 : i32 to index
    %444 = memref.load %arg1[%443] : memref<64xi32, #tpu.memory_space<smem>>
    %445 = arith.index_cast %444 : i32 to index
    %c0_189 = arith.constant 0 : index
    %446 = vector.load %arg2[%445, %c0_189] : memref<50x128xf32, #tpu.memory_space<vmem>>, vector<1x128xf32>
    %c63 = arith.constant 63 : index
    %c0_190 = arith.constant 0 : index
    %447 = vector.load %arg3[%c63, %c0_190] : memref<64x128xf32, #tpu.memory_space<vmem>>, vector<1x128xf32>
    tpu.vector_store %arg3[%c63, %c0_190], %446 {strides = array<i32>} : memref<64x128xf32, #tpu.memory_space<vmem>>, vector<1x128xf32>,
    return
  }
  func.func @transform_0(%arg0: i32, %arg1: memref<64xi32, #tpu.memory_space<smem>>) -> (i32, i32) {
    %c0_i32 = arith.constant 0 : i32
    %c0_i32_0 = arith.constant 0 : i32
    %c0_i32_1 = arith.constant 0 : i32
    return %c0_i32, %c0_i32_0 : i32, i32
  }
  func.func @transform_1(%arg0: i32, %arg1: memref<64xi32, #tpu.memory_space<smem>>) -> (i32, i32) {
    %c0_i32 = arith.constant 0 : i32
    %c0_i32_0 = arith.constant 0 : i32
    return %arg0, %c0_i32 : i32, i32
  }
}

</mosaic_0001>

<llo_original>
// kernel: tpu_custom_call.1
$region0: #{tpu_custom_call.1}
  #allocation0 [shape = 'u32[]', space=smem, size = 0x4, offset = 0x4, fixed_abs, tag = 'smem constant byte address 0x4 - core index']
  #allocation1 [shape = 'u32[72,128]{1,0:T(1,128)}', space=vmem, size = 0x9000, scoped, tag = 'internal scratch']
  #allocation2 [shape = 's32[1]{0}', space=sflag, size = 0x4, scoped, tag = 'scoped memory for tpu_custom_call.1']
  #allocation3 [shape = 'u8[512]{0}', space=smem, size = 0x200, scoped, tag = 'prefetched SMEM operand 0']
  %s0 = inlined_call_operand.hbm [shape: s32[64], index: 0, kind: input, shape index: {}]
  %s1 = inlined_call_operand.hbm [shape: f32[50,128], index: 1, kind: input, shape index: {}]
  %s2 = inlined_call_operand.hbm [shape: f32[64,128], index: 2, kind: output, shape index: {}]
  %s3 = sld [smem:[#allocation0]]
  $region18: #{tpu_custom_call.1} parent=0
    _
  %s5 = ssub.s32 1, %s3
  %s6 = scalar_select 0, %s5, %s3
  %s8 = sshll.u32 %s0, 4
  %s9 = int_to_ptr.hbm [resolvable:$true] %s8
  %11 = dma.hbm_to_smem %s9, 16, [#allocation3], [#allocation2]
  %13 = dma.done [#allocation2], 16
  %14 = sfence
  $region1: #{tpu_custom_call.1} parent=0
    #allocation4 [shape = 'u8[28672]{0}', space=vmem, size = 0x7000, scoped, tag = 'input window, operand 1, single buffered']
    #allocation5 [shape = 's32[1]{0}', space=sflag, size = 0x4, scoped, tag = 'scoped memory for tpu_custom_call.1']
    #allocation6 [shape = 's32[1]{0}', space=sflag, size = 0x4, scoped, tag = 'scoped memory for tpu_custom_call.1']
    #allocation7 [shape = 'u8[32768]{0}', space=vmem, size = 0x8000, scoped, tag = 'output window, operand 0, single buffered']
    %15 = vsyncpa [#allocation5], 0
    %16 = vsyncpa [#allocation6], 0
    // Predicated region
    $region2: #{tpu_custom_call.1} parent=1 // pred_check
      _
    $region3: #{tpu_custom_call.1} parent=1 // pred_check_branch
      %18 = sbr.rel (0) target = $region5
    $region4: #{tpu_custom_call.1} parent=1 // pred_region
      %20 = vsyncadd [#allocation5], 0
      %s21 = sshll.u32 %s1, 4
      %s22 = int_to_ptr.hbm [resolvable:$true] %s21
      %s23 = sshll.u32 [#allocation4], 4
      %s24 = int_to_ptr.vmem [resolvable:$true] %s23
      %29 = dma.hbm_to_vmem [thread:$0]  %s22, 896, %s24, [#allocation5], 128, 128, 8
    $region5: #{tpu_custom_call.1} parent=1 // pred_fallthru
      _
    // Predicated region
    $region6: #{tpu_custom_call.1} parent=1 // pred_check
      _
    $region7: #{tpu_custom_call.1} parent=1 // pred_check_branch
      %31 = sbr.rel (0) target = $region9
    $region8: #{tpu_custom_call.1} parent=1 // pred_region
      %33 = dma.done [#allocation5], 896
    $region9: #{tpu_custom_call.1} parent=1 // pred_fallthru
      _
    %s34 = smul.u32 0, 64
    %s35 = sld [smem:[#allocation3 + %s34]]
    %s36 = scalar_lea.vmem [#allocation4], %s35
    %v37 = vld [vmem:[%s36] sm:$0x1]
    %38 = vst [vmem:[#allocation7] sm:$0x1] %v37
    %s39 = sadd.s32 %s34, 1
    %s40 = sld [smem:[#allocation3 + %s39]]
    %s41 = scalar_lea.vmem [#allocation4], %s40
    %v42 = vld [vmem:[%s41] sm:$0x1]
    %43 = vst [vmem:[#allocation7 + $0x1] sm:$0x1] %v42
    %s44 = sadd.s32 %s34, 2
    %s45 = sld [smem:[#allocation3 + %s44]]
    %s46 = scalar_lea.vmem [#allocation4], %s45
    %v47 = vld [vmem:[%s46] sm:$0x1]
    %48 = vst [vmem:[#allocation7 + $0x2] sm:$0x1] %v47
    %s49 = sadd.s32 %s34, 3
    %s50 = sld [smem:[#allocation3 + %s49]]
    %s51 = scalar_lea.vmem [#allocation4], %s50
    %v52 = vld [vmem:[%s51] sm:$0x1]
    %53 = vst [vmem:[#allocation7 + $0x3] sm:$0x1] %v52
    %s54 = sadd.s32 %s34, 4
    %s55 = sld [smem:[#allocation3 + %s54]]
    %s56 = scalar_lea.vmem [#allocation4], %s55
    %v57 = vld [vmem:[%s56] sm:$0x1]
    %58 = vst [vmem:[#allocation7 + $0x4] sm:$0x1] %v57
    %s59 = sadd.s32 %s34, 5
    %s60 = sld [smem:[#allocation3 + %s59]]
    %s61 = scalar_lea.vmem [#allocation4], %s60
    %v62 = vld [vmem:[%s61] sm:$0x1]
    %63 = vst [vmem:[#allocation7 + $0x5] sm:$0x1] %v62
    %s64 = sadd.s32 %s34, 6
    %s65 = sld [smem:[#allocation3 + %s64]]
    %s66 = scalar_lea.vmem [#allocation4], %s65
    %v67 = vld [vmem:[%s66] sm:$0x1]
    %68 = vst [vmem:[#allocation7 + $0x6] sm:$0x1] %v67
    %s69 = sadd.s32 %s34, 7
    %s70 = sld [smem:[#allocation3 + %s69]]
    %s71 = scalar_lea.vmem [#allocation4], %s70
    %v72 = vld [vmem:[%s71] sm:$0x1]
    %73 = vst [vmem:[#allocation7 + $0x7] sm:$0x1] %v72
    %s74 = sadd.s32 %s34, 8
    %s75 = sld [smem:[#allocation3 + %s74]]
    %s76 = scalar_lea.vmem [#allocation4], %s75
    %v77 = vld [vmem:[%s76] sm:$0x1]
    %78 = vst [vmem:[#allocation7 + $0x8] sm:$0x1] %v77
    %s79 = sadd.s32 %s34, 9
    %s80 = sld [smem:[#allocation3 + %s79]]
    %s81 = scalar_lea.vmem [#allocation4], %s80
    %v82 = vld [vmem:[%s81] sm:$0x1]
    %83 = vst [vmem:[#allocation7 + $0x9] sm:$0x1] %v82
    %s84 = sadd.s32 %s34, 10
    %s85 = sld [smem:[#allocation3 + %s84]]
    %s86 = scalar_lea.vmem [#allocation4], %s85
    %v87 = vld [vmem:[%s86] sm:$0x1]
    %88 = vst [vmem:[#allocation7 + $0xa] sm:$0x1] %v87
    %s89 = sadd.s32 %s34, 11
    %s90 = sld [smem:[#allocation3 + %s89]]
    %s91 = scalar_lea.vmem [#allocation4], %s90
    %v92 = vld [vmem:[%s91] sm:$0x1]
    %93 = vst [vmem:[#allocation7 + $0xb] sm:$0x1] %v92
    %s94 = sadd.s32 %s34, 12
    %s95 = sld [smem:[#allocation3 + %s94]]
    %s96 = scalar_lea.vmem [#allocation4], %s95
    %v97 = vld [vmem:[%s96] sm:$0x1]
    %98 = vst [vmem:[#allocation7 + $0xc] sm:$0x1] %v97
    %s99 = sadd.s32 %s34, 13
    %s100 = sld [smem:[#allocation3 + %s99]]
    %s101 = scalar_lea.vmem [#allocation4], %s100
    %v102 = vld [vmem:[%s101] sm:$0x1]
    %103 = vst [vmem:[#allocation7 + $0xd] sm:$0x1] %v102
    %s104 = sadd.s32 %s34, 14
    %s105 = sld [smem:[#allocation3 + %s104]]
    %s106 = scalar_lea.vmem [#allocation4], %s105
    %v107 = vld [vmem:[%s106] sm:$0x1]
    %108 = vst [vmem:[#allocation7 + $0xe] sm:$0x1] %v107
    %s109 = sadd.s32 %s34, 15
    %s110 = sld [smem:[#allocation3 + %s109]]
    %s111 = scalar_lea.vmem [#allocation4], %s110
    %v112 = vld [vmem:[%s111] sm:$0x1]
    %113 = vst [vmem:[#allocation7 + $0xf] sm:$0x1] %v112
    %s114 = sadd.s32 %s34, 16
    %s115 = sld [smem:[#allocation3 + %s114]]
    %s116 = scalar_lea.vmem [#allocation4], %s115
    %v117 = vld [vmem:[%s116] sm:$0x1]
    %118 = vst [vmem:[#allocation7 + $0x10] sm:$0x1] %v117
    %s119 = sadd.s32 %s34, 17
    %s120 = sld [smem:[#allocation3 + %s119]]
    %s121 = scalar_lea.vmem [#allocation4], %s120
    %v122 = vld [vmem:[%s121] sm:$0x1]
    %123 = vst [vmem:[#allocation7 + $0x11] sm:$0x1] %v122
    %s124 = sadd.s32 %s34, 18
    %s125 = sld [smem:[#allocation3 + %s124]]
    %s126 = scalar_lea.vmem [#allocation4], %s125
    %v127 = vld [vmem:[%s126] sm:$0x1]
    %128 = vst [vmem:[#allocation7 + $0x12] sm:$0x1] %v127
    %s129 = sadd.s32 %s34, 19
    %s130 = sld [smem:[#allocation3 + %s129]]
    %s131 = scalar_lea.vmem [#allocation4], %s130
    %v132 = vld [vmem:[%s131] sm:$0x1]
    %133 = vst [vmem:[#allocation7 + $0x13] sm:$0x1] %v132
    %s134 = sadd.s32 %s34, 20
    %s135 = sld [smem:[#allocation3 + %s134]]
    %s136 = scalar_lea.vmem [#allocation4], %s135
    %v137 = vld [vmem:[%s136] sm:$0x1]
    %138 = vst [vmem:[#allocation7 + $0x14] sm:$0x1] %v137
    %s139 = sadd.s32 %s34, 21
    %s140 = sld [smem:[#allocation3 + %s139]]
    %s141 = scalar_lea.vmem [#allocation4], %s140
    %v142 = vld [vmem:[%s141] sm:$0x1]
    %143 = vst [vmem:[#allocation7 + $0x15] sm:$0x1] %v142
    %s144 = sadd.s32 %s34, 22
    %s145 = sld [smem:[#allocation3 + %s144]]
    %s146 = scalar_lea.vmem [#allocation4], %s145
    %v147 = vld [vmem:[%s146] sm:$0x1]
    %148 = vst [vmem:[#allocation7 + $0x16] sm:$0x1] %v147
    %s149 = sadd.s32 %s34, 23
    %s150 = sld [smem:[#allocation3 + %s149]]
    %s151 = scalar_lea.vmem [#allocation4], %s150
    %v152 = vld [vmem:[%s151] sm:$0x1]
    %153 = vst [vmem:[#allocation7 + $0x17] sm:$0x1] %v152
    %s154 = sadd.s32 %s34, 24
    %s155 = sld [smem:[#allocation3 + %s154]]
    %s156 = scalar_lea.vmem [#allocation4], %s155
    %v157 = vld [vmem:[%s156] sm:$0x1]
    %158 = vst [vmem:[#allocation7 + $0x18] sm:$0x1] %v157
    %s159 = sadd.s32 %s34, 25
    %s160 = sld [smem:[#allocation3 + %s159]]
    %s161 = scalar_lea.vmem [#allocation4], %s160
    %v162 = vld [vmem:[%s161] sm:$0x1]
    %163 = vst [vmem:[#allocation7 + $0x19] sm:$0x1] %v162
    %s164 = sadd.s32 %s34, 26
    %s165 = sld [smem:[#allocation3 + %s164]]
    %s166 = scalar_lea.vmem [#allocation4], %s165
    %v167 = vld [vmem:[%s166] sm:$0x1]
    %168 = vst [vmem:[#allocation7 + $0x1a] sm:$0x1] %v167
    %s169 = sadd.s32 %s34, 27
    %s170 = sld [smem:[#allocation3 + %s169]]
    %s171 = scalar_lea.vmem [#allocation4], %s170
    %v172 = vld [vmem:[%s171] sm:$0x1]
    %173 = vst [vmem:[#allocation7 + $0x1b] sm:$0x1] %v172
    %s174 = sadd.s32 %s34, 28
    %s175 = sld [smem:[#allocation3 + %s174]]
    %s176 = scalar_lea.vmem [#allocation4], %s175
    %v177 = vld [vmem:[%s176] sm:$0x1]
    %178 = vst [vmem:[#allocation7 + $0x1c] sm:$0x1] %v177
    %s179 = sadd.s32 %s34, 29
    %s180 = sld [smem:[#allocation3 + %s179]]
    %s181 = scalar_lea.vmem [#allocation4], %s180
    %v182 = vld [vmem:[%s181] sm:$0x1]
    %183 = vst [vmem:[#allocation7 + $0x1d] sm:$0x1] %v182
    %s184 = sadd.s32 %s34, 30
    %s185 = sld [smem:[#allocation3 + %s184]]
    %s186 = scalar_lea.vmem [#allocation4], %s185
    %v187 = vld [vmem:[%s186] sm:$0x1]
    %188 = vst [vmem:[#allocation7 + $0x1e] sm:$0x1] %v187
    %s189 = sadd.s32 %s34, 31
    %s190 = sld [smem:[#allocation3 + %s189]]
    %s191 = scalar_lea.vmem [#allocation4], %s190
    %v192 = vld [vmem:[%s191] sm:$0x1]
    %193 = vst [vmem:[#allocation7 + $0x1f] sm:$0x1] %v192
    %s194 = sadd.s32 %s34, 32
    %s195 = sld [smem:[#allocation3 + %s194]]
    %s196 = scalar_lea.vmem [#allocation4], %s195
    %v197 = vld [vmem:[%s196] sm:$0x1]
    %198 = vst [vmem:[#allocation7 + $0x20] sm:$0x1] %v197
    %s199 = sadd.s32 %s34, 33
    %s200 = sld [smem:[#allocation3 + %s199]]
    %s201 = scalar_lea.vmem [#allocation4], %s200
    %v202 = vld [vmem:[%s201] sm:$0x1]
    %203 = vst [vmem:[#allocation7 + $0x21] sm:$0x1] %v202
    %s204 = sadd.s32 %s34, 34
    %s205 = sld [smem:[#allocation3 + %s204]]
    %s206 = scalar_lea.vmem [#allocation4], %s205
    %v207 = vld [vmem:[%s206] sm:$0x1]
    %208 = vst [vmem:[#allocation7 + $0x22] sm:$0x1] %v207
    %s209 = sadd.s32 %s34, 35
    %s210 = sld [smem:[#allocation3 + %s209]]
    %s211 = scalar_lea.vmem [#allocation4], %s210
    %v212 = vld [vmem:[%s211] sm:$0x1]
    %213 = vst [vmem:[#allocation7 + $0x23] sm:$0x1] %v212
    %s214 = sadd.s32 %s34, 36
    %s215 = sld [smem:[#allocation3 + %s214]]
    %s216 = scalar_lea.vmem [#allocation4], %s215
    %v217 = vld [vmem:[%s216] sm:$0x1]
    %218 = vst [vmem:[#allocation7 + $0x24] sm:$0x1] %v217
    %s219 = sadd.s32 %s34, 37
    %s220 = sld [smem:[#allocation3 + %s219]]
    %s221 = scalar_lea.vmem [#allocation4], %s220
    %v222 = vld [vmem:[%s221] sm:$0x1]
    %223 = vst [vmem:[#allocation7 + $0x25] sm:$0x1] %v222
    %s224 = sadd.s32 %s34, 38
    %s225 = sld [smem:[#allocation3 + %s224]]
    %s226 = scalar_lea.vmem [#allocation4], %s225
    %v227 = vld [vmem:[%s226] sm:$0x1]
    %228 = vst [vmem:[#allocation7 + $0x26] sm:$0x1] %v227
    %s229 = sadd.s32 %s34, 39
    %s230 = sld [smem:[#allocation3 + %s229]]
    %s231 = scalar_lea.vmem [#allocation4], %s230
    %v232 = vld [vmem:[%s231] sm:$0x1]
    %233 = vst [vmem:[#allocation7 + $0x27] sm:$0x1] %v232
    %s234 = sadd.s32 %s34, 40
    %s235 = sld [smem:[#allocation3 + %s234]]
    %s236 = scalar_lea.vmem [#allocation4], %s235
    %v237 = vld [vmem:[%s236] sm:$0x1]
    %238 = vst [vmem:[#allocation7 + $0x28] sm:$0x1] %v237
    %s239 = sadd.s32 %s34, 41
    %s240 = sld [smem:[#allocation3 + %s239]]
    %s241 = scalar_lea.vmem [#allocation4], %s240
    %v242 = vld [vmem:[%s241] sm:$0x1]
    %243 = vst [vmem:[#allocation7 + $0x29] sm:$0x1] %v242
    %s244 = sadd.s32 %s34, 42
    %s245 = sld [smem:[#allocation3 + %s244]]
    %s246 = scalar_lea.vmem [#allocation4], %s245
    %v247 = vld [vmem:[%s246] sm:$0x1]
    %248 = vst [vmem:[#allocation7 + $0x2a] sm:$0x1] %v247
    %s249 = sadd.s32 %s34, 43
    %s250 = sld [smem:[#allocation3 + %s249]]
    %s251 = scalar_lea.vmem [#allocation4], %s250
    %v252 = vld [vmem:[%s251] sm:$0x1]
    %253 = vst [vmem:[#allocation7 + $0x2b] sm:$0x1] %v252
    %s254 = sadd.s32 %s34, 44
    %s255 = sld [smem:[#allocation3 + %s254]]
    %s256 = scalar_lea.vmem [#allocation4], %s255
    %v257 = vld [vmem:[%s256] sm:$0x1]
    %258 = vst [vmem:[#allocation7 + $0x2c] sm:$0x1] %v257
    %s259 = sadd.s32 %s34, 45
    %s260 = sld [smem:[#allocation3 + %s259]]
    %s261 = scalar_lea.vmem [#allocation4], %s260
    %v262 = vld [vmem:[%s261] sm:$0x1]
    %263 = vst [vmem:[#allocation7 + $0x2d] sm:$0x1] %v262
    %s264 = sadd.s32 %s34, 46
    %s265 = sld [smem:[#allocation3 + %s264]]
    %s266 = scalar_lea.vmem [#allocation4], %s265
    %v267 = vld [vmem:[%s266] sm:$0x1]
    %268 = vst [vmem:[#allocation7 + $0x2e] sm:$0x1] %v267
    %s269 = sadd.s32 %s34, 47
    %s270 = sld [smem:[#allocation3 + %s269]]
    %s271 = scalar_lea.vmem [#allocation4], %s270
    %v272 = vld [vmem:[%s271] sm:$0x1]
    %273 = vst [vmem:[#allocation7 + $0x2f] sm:$0x1] %v272
    %s274 = sadd.s32 %s34, 48
    %s275 = sld [smem:[#allocation3 + %s274]]
    %s276 = scalar_lea.vmem [#allocation4], %s275
    %v277 = vld [vmem:[%s276] sm:$0x1]
    %278 = vst [vmem:[#allocation7 + $0x30] sm:$0x1] %v277
    %s279 = sadd.s32 %s34, 49
    %s280 = sld [smem:[#allocation3 + %s279]]
    %s281 = scalar_lea.vmem [#allocation4], %s280
    %v282 = vld [vmem:[%s281] sm:$0x1]
    %283 = vst [vmem:[#allocation7 + $0x31] sm:$0x1] %v282
    %s284 = sadd.s32 %s34, 50
    %s285 = sld [smem:[#allocation3 + %s284]]
    %s286 = scalar_lea.vmem [#allocation4], %s285
    %v287 = vld [vmem:[%s286] sm:$0x1]
    %288 = vst [vmem:[#allocation7 + $0x32] sm:$0x1] %v287
    %s289 = sadd.s32 %s34, 51
    %s290 = sld [smem:[#allocation3 + %s289]]
    %s291 = scalar_lea.vmem [#allocation4], %s290
    %v292 = vld [vmem:[%s291] sm:$0x1]
    %293 = vst [vmem:[#allocation7 + $0x33] sm:$0x1] %v292
    %s294 = sadd.s32 %s34, 52
    %s295 = sld [smem:[#allocation3 + %s294]]
    %s296 = scalar_lea.vmem [#allocation4], %s295
    %v297 = vld [vmem:[%s296] sm:$0x1]
    %298 = vst [vmem:[#allocation7 + $0x34] sm:$0x1] %v297
    %s299 = sadd.s32 %s34, 53
    %s300 = sld [smem:[#allocation3 + %s299]]
    %s301 = scalar_lea.vmem [#allocation4], %s300
    %v302 = vld [vmem:[%s301] sm:$0x1]
    %303 = vst [vmem:[#allocation7 + $0x35] sm:$0x1] %v302
    %s304 = sadd.s32 %s34, 54
    %s305 = sld [smem:[#allocation3 + %s304]]
    %s306 = scalar_lea.vmem [#allocation4], %s305
    %v307 = vld [vmem:[%s306] sm:$0x1]
    %308 = vst [vmem:[#allocation7 + $0x36] sm:$0x1] %v307
    %s309 = sadd.s32 %s34, 55
    %s310 = sld [smem:[#allocation3 + %s309]]
    %s311 = scalar_lea.vmem [#allocation4], %s310
    %v312 = vld [vmem:[%s311] sm:$0x1]
    %313 = vst [vmem:[#allocation7 + $0x37] sm:$0x1] %v312
    %s314 = sadd.s32 %s34, 56
    %s315 = sld [smem:[#allocation3 + %s314]]
    %s316 = scalar_lea.vmem [#allocation4], %s315
    %v317 = vld [vmem:[%s316] sm:$0x1]
    %318 = vst [vmem:[#allocation7 + $0x38] sm:$0x1] %v317
    %s319 = sadd.s32 %s34, 57
    %s320 = sld [smem:[#allocation3 + %s319]]
    %s321 = scalar_lea.vmem [#allocation4], %s320
    %v322 = vld [vmem:[%s321] sm:$0x1]
    %323 = vst [vmem:[#allocation7 + $0x39] sm:$0x1] %v322
    %s324 = sadd.s32 %s34, 58
    %s325 = sld [smem:[#allocation3 + %s324]]
    %s326 = scalar_lea.vmem [#allocation4], %s325
    %v327 = vld [vmem:[%s326] sm:$0x1]
    %328 = vst [vmem:[#allocation7 + $0x3a] sm:$0x1] %v327
    %s329 = sadd.s32 %s34, 59
    %s330 = sld [smem:[#allocation3 + %s329]]
    %s331 = scalar_lea.vmem [#allocation4], %s330
    %v332 = vld [vmem:[%s331] sm:$0x1]
    %333 = vst [vmem:[#allocation7 + $0x3b] sm:$0x1] %v332
    %s334 = sadd.s32 %s34, 60
    %s335 = sld [smem:[#allocation3 + %s334]]
    %s336 = scalar_lea.vmem [#allocation4], %s335
    %v337 = vld [vmem:[%s336] sm:$0x1]
    %338 = vst [vmem:[#allocation7 + $0x3c] sm:$0x1] %v337
    %s339 = sadd.s32 %s34, 61
    %s340 = sld [smem:[#allocation3 + %s339]]
    %s341 = scalar_lea.vmem [#allocation4], %s340
    %v342 = vld [vmem:[%s341] sm:$0x1]
    %343 = vst [vmem:[#allocation7 + $0x3d] sm:$0x1] %v342
    %s344 = sadd.s32 %s34, 62
    %s345 = sld [smem:[#allocation3 + %s344]]
    %s346 = scalar_lea.vmem [#allocation4], %s345
    %v347 = vld [vmem:[%s346] sm:$0x1]
    %348 = vst [vmem:[#allocation7 + $0x3e] sm:$0x1] %v347
    %s349 = sadd.s32 %s34, 63
    %s350 = sld [smem:[#allocation3 + %s349]]
    %s351 = scalar_lea.vmem [#allocation4], %s350
    %v352 = vld [vmem:[%s351] sm:$0x1]
    %353 = vst [vmem:[#allocation7 + $0x3f] sm:$0x1] %v352
    // Predicated region
    $region10: #{tpu_custom_call.1} parent=1 // pred_check
      _
    $region11: #{tpu_custom_call.1} parent=1 // pred_check_branch
      %355 = sbr.rel (0) target = $region13
    $region12: #{tpu_custom_call.1} parent=1 // pred_region
      %357 = vsyncadd [#allocation6], 0
      %s358 = sshll.u32 [#allocation7], 4
      %s359 = int_to_ptr.vmem [resolvable:$true] %s358
      %s360 = sshll.u32 %s2, 4
      %s361 = int_to_ptr.hbm [resolvable:$true] %s360
      %366 = dma.vmem_to_hbm [thread:$0]  %s359, 1024, %s361, [#allocation6], 128, 128, 8
    $region13: #{tpu_custom_call.1} parent=1 // pred_fallthru
      _
    // Predicated region
    $region14: #{tpu_custom_call.1} parent=1 // pred_check
      _
    $region15: #{tpu_custom_call.1} parent=1 // pred_check_branch
      %368 = sbr.rel (0) target = $region17
    $region16: #{tpu_custom_call.1} parent=1 // pred_region
      %370 = dma.done [#allocation6], 1024
    $region17: #{tpu_custom_call.1} parent=1 // pred_fallthru
      _
    %371 = vsyncpa [#allocation5], 1
    %372 = vsyncpa [#allocation6], 1

</llo_original>
